<compile_context>
chip_gen: v7x
topology: tpu7x:2x2x1
jax: 0.10.0
libtpu: 0.0.40
codegen_flags: <defaults>
</compile_context>

<pallas_src>
import functools

import jax
import jax.numpy as jnp
from jax.experimental import pallas as pl
from jax.experimental.pallas import tpu as pltpu

BN_EPS = 1e-5
LEAKY_SLOPE = 0.01  # nn.LeakyReLU default negative_slope


def _leaky_relu(x):
    return jnp.where(x >= 0, x, LEAKY_SLOPE * x)


def _zero_halos(ref, m, L):
    """Zero only the halo rows of a frame-shaped ref (aligned, tiny stores)."""
    blk_n, Fp, C = ref.shape
    if m > 0:
        ref[:, :m, :] = jnp.zeros((blk_n, m, C), ref.dtype)
    if Fp - m - L > 0:
        ref[:, m + L:, :] = jnp.zeros((blk_n, Fp - m - L, C), ref.dtype)


def _conv_interior(frame, w_ref, b_row, m, pad, L, mxu_dtype):
    """K-tap 1D conv over the interior rows of `frame`, returned as an f32 value.

    frame: (blk_n, Fp, Cin) value (already in mxu_dtype) whose non-interior rows are
    zero (implicit padding).  Each tap is an in-register sublane-shift slice -> one
    (blk_n*L, Cin)@(Cin, Cout) MXU matmul with f32 accumulation.
    """
    blk_n, Fp, Cin = frame.shape
    K, _, Cout = w_ref.shape
    acc = None
    for k in range(K):
        s = m - pad + k
        tap = frame[:, s:s + L, :].reshape(blk_n * L, Cin)
        y = jnp.dot(tap, w_ref[k], preferred_element_type=jnp.float32)
        acc = y if acc is None else acc + y
    acc = acc + b_row                                  # bias in f32
    return acc.reshape(blk_n, L, Cout)


def _write_block_stats(stats_ref, interior):
    """Per-block BatchNorm partials: block mean and *centered* M2 (combined later)."""
    blk_n, L, C = interior.shape
    v = interior.reshape(blk_n * L, C)
    mean_b = jnp.mean(v, axis=0, keepdims=True)        # (1, C)
    d = v - mean_b
    m2_b = jnp.sum(d * d, axis=0, keepdims=True)       # (1, C)
    stats_ref[:, 0:1, :] = mean_b.reshape(1, 1, C)
    stats_ref[:, 1:2, :] = m2_b.reshape(1, 1, C)


# ---------------- stage A: conv1 + bias, BN1 partial stats ----------------
def _conv1_kernel(m, pad, L, mxu_dtype,
                  x_ref, w_ref, b_ref, c1_ref, stats_ref):
    frame = x_ref[...].astype(mxu_dtype)               # halos already zero in xpad
    interior = _conv_interior(frame, w_ref, b_ref[...], m, pad, L, mxu_dtype)
    _write_block_stats(stats_ref, interior)            # stats from f32, pre-downcast
    _zero_halos(c1_ref, m, L)
    c1_ref[:, m:m + L, :] = interior.astype(c1_ref.dtype)


# ------------- stage B: bn1 + act1 + conv2 + bias, BN2 partial stats -------------
def _conv2_kernel(m, pad, L, mxu_dtype,
                  c1_ref, scale1_ref, shift1_ref, w_ref, b_ref, c2_ref, stats_ref):
    blk_n, Fp, C = c1_ref.shape
    # BN1 (pre-fused scale/shift) + LeakyReLU in f32 on the VPU.
    h = _leaky_relu(c1_ref[...].astype(jnp.float32) * scale1_ref[...] + shift1_ref[...])
    # Re-zero the non-interior rows so conv2 sees zero padding (edge mask, no scratch).
    l_idx = jax.lax.broadcasted_iota(jnp.int32, (blk_n, Fp, C), 1)
    h = jnp.where((l_idx >= m) & (l_idx < m + L), h, 0.0).astype(mxu_dtype)
    interior = _conv_interior(h, w_ref, b_ref[...], m, pad, L, mxu_dtype)
    _write_block_stats(stats_ref, interior)
    c2_ref[...] = interior.astype(c2_ref.dtype)        # interior-only (blk_n, L, C)


# ---------------- stage C: bn2 + identity shortcut + act2 ----------------
def _residual_kernel(c2_ref, x_ref, scale2_ref, shift2_ref, o_ref):
    c2 = c2_ref[...].astype(jnp.float32)
    shortcut = x_ref[...]
    o_ref[...] = _leaky_relu(
        c2 * scale2_ref[...] + shift2_ref[...] + shortcut).astype(o_ref.dtype)


def _combine_bn(stats, n_per_block, n_total, gamma, beta):
    """Chan/Welford combine of per-block (mean, M2) -> fused BN scale/shift (f32)."""
    means = stats[:, 0, :]
    m2s = stats[:, 1, :]
    mean = jnp.mean(means, axis=0)
    m2 = jnp.sum(m2s, axis=0) + n_per_block * jnp.sum((means - mean) ** 2, axis=0)
    var = m2 / n_total                                  # biased, as BN normalization uses
    scale = gamma.astype(jnp.float32) * jax.lax.rsqrt(var + BN_EPS)
    shift = beta.astype(jnp.float32) - mean * scale
    return scale.reshape(1, -1), shift.reshape(1, -1)


def basic_block_forward(x_ncl, params, ker_size=3, *, blk_n=1,
                        mxu_dtype=jnp.bfloat16, store_dtype=None):
    """BasicBlock forward.  x_ncl: (N, C, L) float32, PyTorch Conv1d layout."""
    w1, b1, g1, be1, w2, b2, g2, be2 = params
    if store_dtype is None:
        store_dtype = mxu_dtype
    N, Cin, L = x_ncl.shape
    Cout = w1.shape[0]
    K = ker_size
    pad = K // 2
    assert Cin == Cout, "identity shortcut requires inplanes == planes (downsample=None)"
    assert N % blk_n == 0

    # Frame geometry: interior rows [m, m+L); left halo is a multiple of 8 sublanes so
    # every conv-tap slice is an in-register shift and every ref load/store is aligned.
    m = max(8, ((pad + 7) // 8) * 8)
    Fp = ((m + L + pad + 7) // 8) * 8
    G = N // blk_n

    # NCL -> NLC + halo pad (one fused XLA op on the way in).
    x_nlc = jnp.transpose(x_ncl, (0, 2, 1)).astype(jnp.float32)
    xpad = jnp.pad(x_nlc, ((0, 0), (m, Fp - m - L), (0, 0)))

    # Conv weights (Cout, Cin, K) -> (K, Cin, Cout); MXU operands in mxu_dtype.
    w1_t = jnp.transpose(w1, (2, 1, 0)).astype(mxu_dtype)
    w2_t = jnp.transpose(w2, (2, 1, 0)).astype(mxu_dtype)
    row = lambda v: v.reshape(1, -1).astype(jnp.float32)
    b1_row, b2_row = row(b1), row(b2)

    blk = lambda shape: pl.BlockSpec(shape, lambda i: (i, 0, 0))      # batch-tiled
    rep3 = lambda a: pl.BlockSpec(a.shape, lambda i: (0, 0, 0))       # grid-invariant
    rep2 = lambda a: pl.BlockSpec(a.shape, lambda i: (0, 0))

    est = 8 * blk_n * Fp * max(Cin, Cout) * 4 + (1 << 20)
    cp = pltpu.CompilerParams(
        dimension_semantics=("parallel",),             # shard blocks across TCs (v7x)
        vmem_limit_bytes=int(min(max(est, 16 << 20), 32 << 20)),
    )

    # ---- stage A: conv1 ----
    c1, s1 = pl.pallas_call(
        functools.partial(_conv1_kernel, m, pad, L, mxu_dtype),
        grid=(G,),
        in_specs=[blk((blk_n, Fp, Cin)), rep3(w1_t), rep2(b1_row)],
        out_specs=[blk((blk_n, Fp, Cout)), blk((1, 2, Cout))],
        out_shape=[jax.ShapeDtypeStruct((N, Fp, Cout), store_dtype),
                   jax.ShapeDtypeStruct((G, 2, Cout), jnp.float32)],
        compiler_params=cp,
    )(xpad, w1_t, b1_row)
    scale1, shift1 = _combine_bn(s1, blk_n * L, N * L, g1, be1)

    # ---- stage B: bn1 + act1 + conv2 ----
    c2, s2 = pl.pallas_call(
        functools.partial(_conv2_kernel, m, pad, L, mxu_dtype),
        grid=(G,),
        in_specs=[blk((blk_n, Fp, Cout)), rep2(scale1), rep2(shift1),
                  rep3(w2_t), rep2(b2_row)],
        out_specs=[blk((blk_n, L, Cout)), blk((1, 2, Cout))],
        out_shape=[jax.ShapeDtypeStruct((N, L, Cout), store_dtype),
                   jax.ShapeDtypeStruct((G, 2, Cout), jnp.float32)],
        compiler_params=cp,
    )(c1, scale1, shift1, w2_t, b2_row)
    scale2, shift2 = _combine_bn(s2, blk_n * L, N * L, g2, be2)

    # ---- stage C: bn2 + residual + act2 ----
    out_nlc = pl.pallas_call(
        _residual_kernel,
        grid=(G,),
        in_specs=[blk((blk_n, L, Cout)), blk((blk_n, L, Cin)),
                  rep2(scale2), rep2(shift2)],
        out_specs=blk((blk_n, L, Cout)),
        out_shape=jax.ShapeDtypeStruct((N, L, Cout), jnp.float32),
        compiler_params=cp,
    )(c2, x_nlc, scale2, shift2)

    return jnp.transpose(out_nlc, (0, 2, 1))  # back to (N, C, L)


def reference_forward(x_ncl, params, ker_size=3):
    """Pure-JAX reference mirroring the PyTorch forward (training-mode BN)."""
    w1, b1, g1, be1, w2, b2, g2, be2 = params
    pad = ker_size // 2

    def conv1d(x, w, b):
        y = jax.lax.conv_general_dilated(
            x, w, window_strides=(1,), padding=[(pad, pad)],
            dimension_numbers=("NCH", "OIH", "NCH"),
            precision=jax.lax.Precision.HIGHEST)
        return y + b[None, :, None]

    def bn(x, g, be):
        mean = jnp.mean(x, axis=(0, 2), keepdims=True)
        var = jnp.mean((x - mean) ** 2, axis=(0, 2), keepdims=True)
        return (x - mean) / jnp.sqrt(var + BN_EPS) * g[None, :, None] + be[None, :, None]

    lrelu = lambda v: jnp.where(v >= 0, v, LEAKY_SLOPE * v)
    y = lrelu(bn(conv1d(x_ncl, w1, b1), g1, be1))
    y = bn(conv1d(y, w2, b2), g2, be2)
    return lrelu(y + x_ncl)


if __name__ == "__main__":
    # Small shapes: batch=2, inplanes=planes=8, seq length=16, kernel size=3.
    N, C, L, K = 2, 8, 16, 3
    key = jax.random.PRNGKey(0)
    k_x, k_w1, k_b1, k_w2, k_b2 = jax.random.split(key, 5)

    x = jax.random.normal(k_x, (N, C, L), dtype=jnp.float32)
    fan_in = C * K
    w1 = jax.random.normal(k_w1, (C, C, K), dtype=jnp.float32) / jnp.sqrt(fan_in)
    b1 = jax.random.normal(k_b1, (C,), dtype=jnp.float32) * 0.1
    w2 = jax.random.normal(k_w2, (C, C, K), dtype=jnp.float32) / jnp.sqrt(fan_in)
    b2 = jax.random.normal(k_b2, (C,), dtype=jnp.float32) * 0.1
    # BatchNorm1d default init: weight=1, bias=0.
    g1, be1 = jnp.ones((C,), jnp.float32), jnp.zeros((C,), jnp.float32)
    g2, be2 = jnp.ones((C,), jnp.float32), jnp.zeros((C,), jnp.float32)
    params = (w1, b1, g1, be1, w2, b2, g2, be2)

    ref = jax.block_until_ready(reference_forward(x, params, ker_size=K))

    # f32 MXU-operand / f32 storage path: tight functional check.
    fwd_f32 = jax.jit(functools.partial(basic_block_forward, ker_size=K,
                                        mxu_dtype=jnp.float32))
    out_f32 = jax.block_until_ready(fwd_f32(x, params))
    assert out_f32.shape == (N, C, L), out_f32.shape
    assert jnp.allclose(out_f32, ref, atol=2e-2, rtol=2e-2), \
        float(jnp.max(jnp.abs(out_f32 - ref)))

    # bf16 MXU-operand / bf16 intermediate-storage path (production default): looser
    # check (bf16 operand + storage rounding; accumulation and all VPU math stay f32).
    fwd_bf16 = jax.jit(functools.partial(basic_block_forward, ker_size=K,
                                         mxu_dtype=jnp.bfloat16))
    out_bf16 = jax.block_until_ready(fwd_bf16(x, params))
    assert out_bf16.shape == (N, C, L), out_bf16.shape
    assert jnp.allclose(out_bf16, ref, atol=1e-1, rtol=1e-1), \
        float(jnp.max(jnp.abs(out_bf16 - ref)))

    print("KERNEL_OK")
</pallas_src>

<mosaic_0001>
module attributes {stable_mosaic.version = 11 : i64} {
  func.func @_conv1_kernel(%arg0: i32, %arg1: memref<1x32x8xf32, #tpu.memory_space<vmem>>, %arg2: memref<3x8x8xf32, #tpu.memory_space<vmem>>, %arg3: memref<1x8xf32, #tpu.memory_space<vmem>>, %arg4: memref<1x32x8xf32, #tpu.memory_space<vmem>>, %arg5: memref<1x2x8xf32, #tpu.memory_space<vmem>>) attributes {dimension_semantics = [#tpu.dimension_semantics<parallel>], iteration_bounds = array<i64: 2>, scalar_prefetch = 0 : i64, scratch_operands = 0 : i64, tpu.core_type = #tpu.core_type<tc>, window_params = [{transform_indices = @transform_0, window_bounds = array<i64: 1, 32, 8>}, {pipeline_mode = #tpu.pipeline_mode<synchronous>, transform_indices = @transform_1, window_bounds = array<i64: 3, 8, 8>}, {pipeline_mode = #tpu.pipeline_mode<synchronous>, transform_indices = @transform_2, window_bounds = array<i64: 1, 8>}, {transform_indices = @transform_3, window_bounds = array<i64: 1, 32, 8>}, {transform_indices = @transform_4, window_bounds = array<i64: 1, 2, 8>}]} {
    %c0 = arith.constant 0 : index
    %c0_0 = arith.constant 0 : index
    %c0_1 = arith.constant 0 : index
    %0 = vector.load %arg1[%c0, %c0_0, %c0_1] : memref<1x32x8xf32, #tpu.memory_space<vmem>>, vector<1x32x8xf32>
    %c0_2 = arith.constant 0 : index
    %c0_3 = arith.constant 0 : index
    %1 = vector.load %arg3[%c0_2, %c0_3] : memref<1x8xf32, #tpu.memory_space<vmem>>, vector<1x8xf32>
    %2 = vector.extract_strided_slice %0 {offsets = [0, 7, 0], sizes = [1, 16, 8], strides = [1, 1, 1]} : vector<1x32x8xf32> to vector<1x16x8xf32>
    %3 = vector.shape_cast %2 : vector<1x16x8xf32> to vector<16x8xf32>
    %c0_4 = arith.constant 0 : index
    %c0_5 = arith.constant 0 : index
    %c0_6 = arith.constant 0 : index
    %4 = vector.load %arg2[%c0_4, %c0_5, %c0_6] : memref<3x8x8xf32, #tpu.memory_space<vmem>>, vector<1x8x8xf32>
    %5 = vector.shape_cast %4 : vector<1x8x8xf32> to vector<8x8xf32>
    %cst = arith.constant dense<0.000000e+00> : vector<16x8xf32>
    %6 = tpu.matmul %3, %5, %cst {dimension_numbers = #tpu.dot_dimension_numbers<[1], [0], [0], [1], [0, 0, 1, 1], [], []>} : vector<16x8xf32>, vector<8x8xf32>, vector<16x8xf32> -> vector<16x8xf32>
    %7 = vector.extract_strided_slice %0 {offsets = [0, 8, 0], sizes = [1, 16, 8], strides = [1, 1, 1]} : vector<1x32x8xf32> to vector<1x16x8xf32>
    %8 = vector.shape_cast %7 : vector<1x16x8xf32> to vector<16x8xf32>
    %c1 = arith.constant 1 : index
    %c0_7 = arith.constant 0 : index
    %c0_8 = arith.constant 0 : index
    %9 = vector.load %arg2[%c1, %c0_7, %c0_8] : memref<3x8x8xf32, #tpu.memory_space<vmem>>, vector<1x8x8xf32>
    %10 = vector.shape_cast %9 : vector<1x8x8xf32> to vector<8x8xf32>
    %cst_9 = arith.constant dense<0.000000e+00> : vector<16x8xf32>
    %11 = tpu.matmul %8, %10, %cst_9 {dimension_numbers = #tpu.dot_dimension_numbers<[1], [0], [0], [1], [0, 0, 1, 1], [], []>} : vector<16x8xf32>, vector<8x8xf32>, vector<16x8xf32> -> vector<16x8xf32>
    %12 = arith.addf %6, %11 : vector<16x8xf32>
    %13 = vector.extract_strided_slice %0 {offsets = [0, 9, 0], sizes = [1, 16, 8], strides = [1, 1, 1]} : vector<1x32x8xf32> to vector<1x16x8xf32>
    %14 = vector.shape_cast %13 : vector<1x16x8xf32> to vector<16x8xf32>
    %c2 = arith.constant 2 : index
    %c0_10 = arith.constant 0 : index
    %c0_11 = arith.constant 0 : index
    %15 = vector.load %arg2[%c2, %c0_10, %c0_11] : memref<3x8x8xf32, #tpu.memory_space<vmem>>, vector<1x8x8xf32>
    %16 = vector.shape_cast %15 : vector<1x8x8xf32> to vector<8x8xf32>
    %cst_12 = arith.constant dense<0.000000e+00> : vector<16x8xf32>
    %17 = tpu.matmul %14, %16, %cst_12 {dimension_numbers = #tpu.dot_dimension_numbers<[1], [0], [0], [1], [0, 0, 1, 1], [], []>} : vector<16x8xf32>, vector<8x8xf32>, vector<16x8xf32> -> vector<16x8xf32>
    %18 = arith.addf %12, %17 : vector<16x8xf32>
    %19 = vector.broadcast %1 : vector<1x8xf32> to vector<16x8xf32>
    %20 = arith.addf %18, %19 : vector<16x8xf32>
    %21 = vector.shape_cast %20 : vector<16x8xf32> to vector<1x16x8xf32>
    %22 = vector.shape_cast %21 : vector<1x16x8xf32> to vector<16x8xf32>
    %cst_13 = arith.constant dense<0.000000e+00> : vector<8xf32>
    %23 = vector.multi_reduction <add>, %22, %cst_13 [0] : vector<16x8xf32> to vector<8xf32>
    %24 = vector.shape_cast %23 : vector<8xf32> to vector<1x8xf32>
    %cst_14 = arith.constant 1.600000e+01 : f32
    %25 = vector.broadcast %cst_14 : f32 to vector<1x8xf32>
    %26 = arith.divf %24, %25 : vector<1x8xf32>
    %27 = vector.broadcast %26 : vector<1x8xf32> to vector<16x8xf32>
    %28 = arith.subf %22, %27 : vector<16x8xf32>
    %29 = arith.mulf %28, %28 : vector<16x8xf32>
    %cst_15 = arith.constant dense<0.000000e+00> : vector<8xf32>
    %30 = vector.multi_reduction <add>, %29, %cst_15 [0] : vector<16x8xf32> to vector<8xf32>
    %31 = vector.shape_cast %30 : vector<8xf32> to vector<1x8xf32>
    %32 = vector.shape_cast %26 : vector<1x8xf32> to vector<1x1x8xf32>
    %c0_16 = arith.constant 0 : index
    %c0_17 = arith.constant 0 : index
    %c0_18 = arith.constant 0 : index
    %33 = vector.load %arg5[%c0_16, %c0_17, %c0_18] : memref<1x2x8xf32, #tpu.memory_space<vmem>>, vector<1x1x8xf32>
    tpu.vector_store %arg5[%c0_16, %c0_17, %c0_18], %32 {strides = array<i32>} : memref<1x2x8xf32, #tpu.memory_space<vmem>>, vector<1x1x8xf32>,
    %34 = vector.shape_cast %31 : vector<1x8xf32> to vector<1x1x8xf32>
    %c0_19 = arith.constant 0 : index
    %c1_20 = arith.constant 1 : index
    %c0_21 = arith.constant 0 : index
    %35 = vector.load %arg5[%c0_19, %c1_20, %c0_21] : memref<1x2x8xf32, #tpu.memory_space<vmem>>, vector<1x1x8xf32>
    tpu.vector_store %arg5[%c0_19, %c1_20, %c0_21], %34 {strides = array<i32>} : memref<1x2x8xf32, #tpu.memory_space<vmem>>, vector<1x1x8xf32>,
    %cst_22 = arith.constant 0.000000e+00 : f32
    %36 = vector.broadcast %cst_22 : f32 to vector<1x8x8xf32>
    %c0_23 = arith.constant 0 : index
    %c0_24 = arith.constant 0 : index
    %c0_25 = arith.constant 0 : index
    %37 = vector.load %arg4[%c0_23, %c0_24, %c0_25] : memref<1x32x8xf32, #tpu.memory_space<vmem>>, vector<1x8x8xf32>
    tpu.vector_store %arg4[%c0_23, %c0_24, %c0_25], %36 {strides = array<i32>} : memref<1x32x8xf32, #tpu.memory_space<vmem>>, vector<1x8x8xf32>,
    %cst_26 = arith.constant 0.000000e+00 : f32
    %38 = vector.broadcast %cst_26 : f32 to vector<1x8x8xf32>
    %c0_27 = arith.constant 0 : index
    %c24 = arith.constant 24 : index
    %c0_28 = arith.constant 0 : index
    %39 = vector.load %arg4[%c0_27, %c24, %c0_28] : memref<1x32x8xf32, #tpu.memory_space<vmem>>, vector<1x8x8xf32>
    tpu.vector_store %arg4[%c0_27, %c24, %c0_28], %38 {strides = array<i32>} : memref<1x32x8xf32, #tpu.memory_space<vmem>>, vector<1x8x8xf32>,
    %c0_29 = arith.constant 0 : index
    %c8 = arith.constant 8 : index
    %c0_30 = arith.constant 0 : index
    %40 = vector.load %arg4[%c0_29, %c8, %c0_30] : memref<1x32x8xf32, #tpu.memory_space<vmem>>, vector<1x16x8xf32>
    tpu.vector_store %arg4[%c0_29, %c8, %c0_30], %21 {strides = array<i32>} : memref<1x32x8xf32, #tpu.memory_space<vmem>>, vector<1x16x8xf32>,
    return
  }
  func.func @transform_0(%arg0: i32) -> (i32, i32, i32) {
    %c0_i32 = arith.constant 0 : i32
    %c0_i32_0 = arith.constant 0 : i32
    %c0_i32_1 = arith.constant 0 : i32
    return %arg0, %c0_i32, %c0_i32_0 : i32, i32, i32
  }
  func.func @transform_1(%arg0: i32) -> (i32, i32, i32) {
    %c0_i32 = arith.constant 0 : i32
    %c0_i32_0 = arith.constant 0 : i32
    %c0_i32_1 = arith.constant 0 : i32
    %c0_i32_2 = arith.constant 0 : i32
    return %c0_i32, %c0_i32_0, %c0_i32_1 : i32, i32, i32
  }
  func.func @transform_2(%arg0: i32) -> (i32, i32) {
    %c0_i32 = arith.constant 0 : i32
    %c0_i32_0 = arith.constant 0 : i32
    %c0_i32_1 = arith.constant 0 : i32
    return %c0_i32, %c0_i32_0 : i32, i32
  }
  func.func @transform_3(%arg0: i32) -> (i32, i32, i32) {
    %c0_i32 = arith.constant 0 : i32
    %c0_i32_0 = arith.constant 0 : i32
    %c0_i32_1 = arith.constant 0 : i32
    return %arg0, %c0_i32, %c0_i32_0 : i32, i32, i32
  }
  func.func @transform_4(%arg0: i32) -> (i32, i32, i32) {
    %c0_i32 = arith.constant 0 : i32
    %c0_i32_0 = arith.constant 0 : i32
    %c0_i32_1 = arith.constant 0 : i32
    return %arg0, %c0_i32, %c0_i32_0 : i32, i32, i32
  }
}

module attributes {stable_mosaic.version = 11 : i64} {
  func.func @_residual_kernel(%arg0: i32, %arg1: memref<1x16x8xf32, #tpu.memory_space<vmem>>, %arg2: memref<1x16x8xf32, #tpu.memory_space<vmem>>, %arg3: memref<1x8xf32, #tpu.memory_space<vmem>>, %arg4: memref<1x8xf32, #tpu.memory_space<vmem>>, %arg5: memref<1x16x8xf32, #tpu.memory_space<vmem>>) attributes {dimension_semantics = [#tpu.dimension_semantics<parallel>], iteration_bounds = array<i64: 2>, scalar_prefetch = 0 : i64, scratch_operands = 0 : i64, tpu.core_type = #tpu.core_type<tc>, window_params = [{transform_indices = @transform_0, window_bounds = array<i64: 1, 16, 8>}, {transform_indices = @transform_1, window_bounds = array<i64: 1, 16, 8>}, {pipeline_mode = #tpu.pipeline_mode<synchronous>, transform_indices = @transform_2, window_bounds = array<i64: 1, 8>}, {pipeline_mode = #tpu.pipeline_mode<synchronous>, transform_indices = @transform_3, window_bounds = array<i64: 1, 8>}, {transform_indices = @transform_4, window_bounds = array<i64: 1, 16, 8>}]} {
    %c0 = arith.constant 0 : index
    %c0_0 = arith.constant 0 : index
    %c0_1 = arith.constant 0 : index
    %0 = vector.load %arg1[%c0, %c0_0, %c0_1] : memref<1x16x8xf32, #tpu.memory_space<vmem>>, vector<1x16x8xf32>
    %c0_2 = arith.constant 0 : index
    %c0_3 = arith.constant 0 : index
    %c0_4 = arith.constant 0 : index
    %1 = vector.load %arg2[%c0_2, %c0_3, %c0_4] : memref<1x16x8xf32, #tpu.memory_space<vmem>>, vector<1x16x8xf32>
    %c0_5 = arith.constant 0 : index
    %c0_6 = arith.constant 0 : index
    %2 = vector.load %arg3[%c0_5, %c0_6] : memref<1x8xf32, #tpu.memory_space<vmem>>, vector<1x8xf32>
    %3 = vector.shape_cast %2 : vector<1x8xf32> to vector<1x1x8xf32>
    %4 = vector.broadcast %3 : vector<1x1x8xf32> to vector<1x16x8xf32>
    %5 = arith.mulf %0, %4 : vector<1x16x8xf32>
    %c0_7 = arith.constant 0 : index
    %c0_8 = arith.constant 0 : index
    %6 = vector.load %arg4[%c0_7, %c0_8] : memref<1x8xf32, #tpu.memory_space<vmem>>, vector<1x8xf32>
    %7 = vector.shape_cast %6 : vector<1x8xf32> to vector<1x1x8xf32>
    %8 = vector.broadcast %7 : vector<1x1x8xf32> to vector<1x16x8xf32>
    %9 = arith.addf %5, %8 : vector<1x16x8xf32>
    %10 = arith.addf %9, %1 : vector<1x16x8xf32>
    %cst = arith.constant 0.000000e+00 : f32
    %11 = vector.broadcast %cst : f32 to vector<1x16x8xf32>
    %12 = arith.cmpf oge, %10, %11 : vector<1x16x8xf32>
    %cst_9 = arith.constant 0.00999999977 : f32
    %13 = vector.broadcast %cst_9 : f32 to vector<1x16x8xf32>
    %14 = arith.mulf %13, %10 : vector<1x16x8xf32>
    %15 = arith.select %12, %10, %14 : vector<1x16x8xi1>, vector<1x16x8xf32>
    %c0_10 = arith.constant 0 : index
    %c0_11 = arith.constant 0 : index
    %c0_12 = arith.constant 0 : index
    %16 = vector.load %arg5[%c0_10, %c0_11, %c0_12] : memref<1x16x8xf32, #tpu.memory_space<vmem>>, vector<1x16x8xf32>
    tpu.vector_store %arg5[%c0_10, %c0_11, %c0_12], %15 {strides = array<i32>} : memref<1x16x8xf32, #tpu.memory_space<vmem>>, vector<1x16x8xf32>,
    return
  }
  func.func @transform_0(%arg0: i32) -> (i32, i32, i32) {
    %c0_i32 = arith.constant 0 : i32
    %c0_i32_0 = arith.constant 0 : i32
    %c0_i32_1 = arith.constant 0 : i32
    return %arg0, %c0_i32, %c0_i32_0 : i32, i32, i32
  }
  func.func @transform_1(%arg0: i32) -> (i32, i32, i32) {
    %c0_i32 = arith.constant 0 : i32
    %c0_i32_0 = arith.constant 0 : i32
    %c0_i32_1 = arith.constant 0 : i32
    return %arg0, %c0_i32, %c0_i32_0 : i32, i32, i32
  }
  func.func @transform_2(%arg0: i32) -> (i32, i32) {
    %c0_i32 = arith.constant 0 : i32
    %c0_i32_0 = arith.constant 0 : i32
    %c0_i32_1 = arith.constant 0 : i32
    return %c0_i32, %c0_i32_0 : i32, i32
  }
  func.func @transform_3(%arg0: i32) -> (i32, i32) {
    %c0_i32 = arith.constant 0 : i32
    %c0_i32_0 = arith.constant 0 : i32
    %c0_i32_1 = arith.constant 0 : i32
    return %c0_i32, %c0_i32_0 : i32, i32
  }
  func.func @transform_4(%arg0: i32) -> (i32, i32, i32) {
    %c0_i32 = arith.constant 0 : i32
    %c0_i32_0 = arith.constant 0 : i32
    %c0_i32_1 = arith.constant 0 : i32
    return %arg0, %c0_i32, %c0_i32_0 : i32, i32, i32
  }
}

module attributes {stable_mosaic.version = 11 : i64} {
  func.func @_conv2_kernel(%arg0: i32, %arg1: memref<1x32x8xf32, #tpu.memory_space<vmem>>, %arg2: memref<1x8xf32, #tpu.memory_space<vmem>>, %arg3: memref<1x8xf32, #tpu.memory_space<vmem>>, %arg4: memref<3x8x8xf32, #tpu.memory_space<vmem>>, %arg5: memref<1x8xf32, #tpu.memory_space<vmem>>, %arg6: memref<1x16x8xf32, #tpu.memory_space<vmem>>, %arg7: memref<1x2x8xf32, #tpu.memory_space<vmem>>) attributes {dimension_semantics = [#tpu.dimension_semantics<parallel>], iteration_bounds = array<i64: 2>, scalar_prefetch = 0 : i64, scratch_operands = 0 : i64, tpu.core_type = #tpu.core_type<tc>, window_params = [{transform_indices = @transform_0, window_bounds = array<i64: 1, 32, 8>}, {pipeline_mode = #tpu.pipeline_mode<synchronous>, transform_indices = @transform_1, window_bounds = array<i64: 1, 8>}, {pipeline_mode = #tpu.pipeline_mode<synchronous>, transform_indices = @transform_2, window_bounds = array<i64: 1, 8>}, {pipeline_mode = #tpu.pipeline_mode<synchronous>, transform_indices = @transform_3, window_bounds = array<i64: 3, 8, 8>}, {pipeline_mode = #tpu.pipeline_mode<synchronous>, transform_indices = @transform_4, window_bounds = array<i64: 1, 8>}, {transform_indices = @transform_5, window_bounds = array<i64: 1, 16, 8>}, {transform_indices = @transform_6, window_bounds = array<i64: 1, 2, 8>}]} {
    %c0 = arith.constant 0 : index
    %c0_0 = arith.constant 0 : index
    %c0_1 = arith.constant 0 : index
    %0 = vector.load %arg1[%c0, %c0_0, %c0_1] : memref<1x32x8xf32, #tpu.memory_space<vmem>>, vector<1x32x8xf32>
    %c0_2 = arith.constant 0 : index
    %c0_3 = arith.constant 0 : index
    %1 = vector.load %arg2[%c0_2, %c0_3] : memref<1x8xf32, #tpu.memory_space<vmem>>, vector<1x8xf32>
    %2 = vector.shape_cast %1 : vector<1x8xf32> to vector<1x1x8xf32>
    %3 = vector.broadcast %2 : vector<1x1x8xf32> to vector<1x32x8xf32>
    %4 = arith.mulf %0, %3 : vector<1x32x8xf32>
    %c0_4 = arith.constant 0 : index
    %c0_5 = arith.constant 0 : index
    %5 = vector.load %arg3[%c0_4, %c0_5] : memref<1x8xf32, #tpu.memory_space<vmem>>, vector<1x8xf32>
    %6 = vector.shape_cast %5 : vector<1x8xf32> to vector<1x1x8xf32>
    %7 = vector.broadcast %6 : vector<1x1x8xf32> to vector<1x32x8xf32>
    %8 = arith.addf %4, %7 : vector<1x32x8xf32>
    %cst = arith.constant 0.000000e+00 : f32
    %9 = vector.broadcast %cst : f32 to vector<1x32x8xf32>
    %10 = arith.cmpf oge, %8, %9 : vector<1x32x8xf32>
    %cst_6 = arith.constant 0.00999999977 : f32
    %11 = vector.broadcast %cst_6 : f32 to vector<1x32x8xf32>
    %12 = arith.mulf %11, %8 : vector<1x32x8xf32>
    %13 = arith.select %10, %8, %12 : vector<1x32x8xi1>, vector<1x32x8xf32>
    %14 = tpu.iota {dimensions = array<i32: 1>} : vector<1x32x8xi32>
    %c8_i32 = arith.constant 8 : i32
    %15 = vector.broadcast %c8_i32 : i32 to vector<1x32x8xi32>
    %16 = arith.cmpi sge, %14, %15 : vector<1x32x8xi32>
    %c24_i32 = arith.constant 24 : i32
    %17 = vector.broadcast %c24_i32 : i32 to vector<1x32x8xi32>
    %18 = arith.cmpi slt, %14, %17 : vector<1x32x8xi32>
    %19 = arith.andi %16, %18 : vector<1x32x8xi1>
    %cst_7 = arith.constant 0.000000e+00 : f32
    %20 = vector.broadcast %cst_7 : f32 to vector<1x32x8xf32>
    %21 = arith.select %19, %13, %20 : vector<1x32x8xi1>, vector<1x32x8xf32>
    %c0_8 = arith.constant 0 : index
    %c0_9 = arith.constant 0 : index
    %22 = vector.load %arg5[%c0_8, %c0_9] : memref<1x8xf32, #tpu.memory_space<vmem>>, vector<1x8xf32>
    %23 = vector.extract_strided_slice %21 {offsets = [0, 7, 0], sizes = [1, 16, 8], strides = [1, 1, 1]} : vector<1x32x8xf32> to vector<1x16x8xf32>
    %24 = vector.shape_cast %23 : vector<1x16x8xf32> to vector<16x8xf32>
    %c0_10 = arith.constant 0 : index
    %c0_11 = arith.constant 0 : index
    %c0_12 = arith.constant 0 : index
    %25 = vector.load %arg4[%c0_10, %c0_11, %c0_12] : memref<3x8x8xf32, #tpu.memory_space<vmem>>, vector<1x8x8xf32>
    %26 = vector.shape_cast %25 : vector<1x8x8xf32> to vector<8x8xf32>
    %cst_13 = arith.constant dense<0.000000e+00> : vector<16x8xf32>
    %27 = tpu.matmul %24, %26, %cst_13 {dimension_numbers = #tpu.dot_dimension_numbers<[1], [0], [0], [1], [0, 0, 1, 1], [], []>} : vector<16x8xf32>, vector<8x8xf32>, vector<16x8xf32> -> vector<16x8xf32>
    %28 = vector.extract_strided_slice %21 {offsets = [0, 8, 0], sizes = [1, 16, 8], strides = [1, 1, 1]} : vector<1x32x8xf32> to vector<1x16x8xf32>
    %29 = vector.shape_cast %28 : vector<1x16x8xf32> to vector<16x8xf32>
    %c1 = arith.constant 1 : index
    %c0_14 = arith.constant 0 : index
    %c0_15 = arith.constant 0 : index
    %30 = vector.load %arg4[%c1, %c0_14, %c0_15] : memref<3x8x8xf32, #tpu.memory_space<vmem>>, vector<1x8x8xf32>
    %31 = vector.shape_cast %30 : vector<1x8x8xf32> to vector<8x8xf32>
    %cst_16 = arith.constant dense<0.000000e+00> : vector<16x8xf32>
    %32 = tpu.matmul %29, %31, %cst_16 {dimension_numbers = #tpu.dot_dimension_numbers<[1], [0], [0], [1], [0, 0, 1, 1], [], []>} : vector<16x8xf32>, vector<8x8xf32>, vector<16x8xf32> -> vector<16x8xf32>
    %33 = arith.addf %27, %32 : vector<16x8xf32>
    %34 = vector.extract_strided_slice %21 {offsets = [0, 9, 0], sizes = [1, 16, 8], strides = [1, 1, 1]} : vector<1x32x8xf32> to vector<1x16x8xf32>
    %35 = vector.shape_cast %34 : vector<1x16x8xf32> to vector<16x8xf32>
    %c2 = arith.constant 2 : index
    %c0_17 = arith.constant 0 : index
    %c0_18 = arith.constant 0 : index
    %36 = vector.load %arg4[%c2, %c0_17, %c0_18] : memref<3x8x8xf32, #tpu.memory_space<vmem>>, vector<1x8x8xf32>
    %37 = vector.shape_cast %36 : vector<1x8x8xf32> to vector<8x8xf32>
    %cst_19 = arith.constant dense<0.000000e+00> : vector<16x8xf32>
    %38 = tpu.matmul %35, %37, %cst_19 {dimension_numbers = #tpu.dot_dimension_numbers<[1], [0], [0], [1], [0, 0, 1, 1], [], []>} : vector<16x8xf32>, vector<8x8xf32>, vector<16x8xf32> -> vector<16x8xf32>
    %39 = arith.addf %33, %38 : vector<16x8xf32>
    %40 = vector.broadcast %22 : vector<1x8xf32> to vector<16x8xf32>
    %41 = arith.addf %39, %40 : vector<16x8xf32>
    %42 = vector.shape_cast %41 : vector<16x8xf32> to vector<1x16x8xf32>
    %43 = vector.shape_cast %42 : vector<1x16x8xf32> to vector<16x8xf32>
    %cst_20 = arith.constant dense<0.000000e+00> : vector<8xf32>
    %44 = vector.multi_reduction <add>, %43, %cst_20 [0] : vector<16x8xf32> to vector<8xf32>
    %45 = vector.shape_cast %44 : vector<8xf32> to vector<1x8xf32>
    %cst_21 = arith.constant 1.600000e+01 : f32
    %46 = vector.broadcast %cst_21 : f32 to vector<1x8xf32>
    %47 = arith.divf %45, %46 : vector<1x8xf32>
    %48 = vector.broadcast %47 : vector<1x8xf32> to vector<16x8xf32>
    %49 = arith.subf %43, %48 : vector<16x8xf32>
    %50 = arith.mulf %49, %49 : vector<16x8xf32>
    %cst_22 = arith.constant dense<0.000000e+00> : vector<8xf32>
    %51 = vector.multi_reduction <add>, %50, %cst_22 [0] : vector<16x8xf32> to vector<8xf32>
    %52 = vector.shape_cast %51 : vector<8xf32> to vector<1x8xf32>
    %53 = vector.shape_cast %47 : vector<1x8xf32> to vector<1x1x8xf32>
    %c0_23 = arith.constant 0 : index
    %c0_24 = arith.constant 0 : index
    %c0_25 = arith.constant 0 : index
    %54 = vector.load %arg7[%c0_23, %c0_24, %c0_25] : memref<1x2x8xf32, #tpu.memory_space<vmem>>, vector<1x1x8xf32>
    tpu.vector_store %arg7[%c0_23, %c0_24, %c0_25], %53 {strides = array<i32>} : memref<1x2x8xf32, #tpu.memory_space<vmem>>, vector<1x1x8xf32>,
    %55 = vector.shape_cast %52 : vector<1x8xf32> to vector<1x1x8xf32>
    %c0_26 = arith.constant 0 : index
    %c1_27 = arith.constant 1 : index
    %c0_28 = arith.constant 0 : index
    %56 = vector.load %arg7[%c0_26, %c1_27, %c0_28] : memref<1x2x8xf32, #tpu.memory_space<vmem>>, vector<1x1x8xf32>
    tpu.vector_store %arg7[%c0_26, %c1_27, %c0_28], %55 {strides = array<i32>} : memref<1x2x8xf32, #tpu.memory_space<vmem>>, vector<1x1x8xf32>,
    %c0_29 = arith.constant 0 : index
    %c0_30 = arith.constant 0 : index
    %c0_31 = arith.constant 0 : index
    %57 = vector.load %arg6[%c0_29, %c0_30, %c0_31] : memref<1x16x8xf32, #tpu.memory_space<vmem>>, vector<1x16x8xf32>
    tpu.vector_store %arg6[%c0_29, %c0_30, %c0_31], %42 {strides = array<i32>} : memref<1x16x8xf32, #tpu.memory_space<vmem>>, vector<1x16x8xf32>,
    return
  }
  func.func @transform_0(%arg0: i32) -> (i32, i32, i32) {
    %c0_i32 = arith.constant 0 : i32
    %c0_i32_0 = arith.constant 0 : i32
    %c0_i32_1 = arith.constant 0 : i32
    return %arg0, %c0_i32, %c0_i32_0 : i32, i32, i32
  }
  func.func @transform_1(%arg0: i32) -> (i32, i32) {
    %c0_i32 = arith.constant 0 : i32
    %c0_i32_0 = arith.constant 0 : i32
    %c0_i32_1 = arith.constant 0 : i32
    return %c0_i32, %c0_i32_0 : i32, i32
  }
  func.func @transform_2(%arg0: i32) -> (i32, i32) {
    %c0_i32 = arith.constant 0 : i32
    %c0_i32_0 = arith.constant 0 : i32
    %c0_i32_1 = arith.constant 0 : i32
    return %c0_i32, %c0_i32_0 : i32, i32
  }
  func.func @transform_3(%arg0: i32) -> (i32, i32, i32) {
    %c0_i32 = arith.constant 0 : i32
    %c0_i32_0 = arith.constant 0 : i32
    %c0_i32_1 = arith.constant 0 : i32
    %c0_i32_2 = arith.constant 0 : i32
    return %c0_i32, %c0_i32_0, %c0_i32_1 : i32, i32, i32
  }
  func.func @transform_4(%arg0: i32) -> (i32, i32) {
    %c0_i32 = arith.constant 0 : i32
    %c0_i32_0 = arith.constant 0 : i32
    %c0_i32_1 = arith.constant 0 : i32
    return %c0_i32, %c0_i32_0 : i32, i32
  }
  func.func @transform_5(%arg0: i32) -> (i32, i32, i32) {
    %c0_i32 = arith.constant 0 : i32
    %c0_i32_0 = arith.constant 0 : i32
    %c0_i32_1 = arith.constant 0 : i32
    return %arg0, %c0_i32, %c0_i32_0 : i32, i32, i32
  }
  func.func @transform_6(%arg0: i32) -> (i32, i32, i32) {
    %c0_i32 = arith.constant 0 : i32
    %c0_i32_0 = arith.constant 0 : i32
    %c0_i32_1 = arith.constant 0 : i32
    return %arg0, %c0_i32, %c0_i32_0 : i32, i32, i32
  }
}

</mosaic_0001>

<llo_original>
// kernel: basic_block_forward.5
$region0: #{basic_block_forward.5}
  #allocation0 [shape = 'u32[]', space=smem, size = 0x4, offset = 0x4, fixed_abs, tag = 'smem constant byte address 0x4 - core index']
  #allocation1 [shape = 'u32[144,128]{1,0:T(1,128)}', space=vmem, size = 0x12000, scoped, tag = 'internal scratch']
  %s0 = inlined_call_operand.vmem [shape: f32[2,16,8], index: 0, kind: input, shape index: {}]
  %s1 = inlined_call_operand.vmem [shape: f32[2,16,8], index: 1, kind: input, shape index: {}]
  %s2 = inlined_call_operand.vmem [shape: f32[1,8], index: 2, kind: input, shape index: {}]
  %s3 = inlined_call_operand.vmem [shape: f32[1,8], index: 3, kind: input, shape index: {}]
  %s4 = inlined_call_operand.vmem [shape: f32[2,16,8], index: 4, kind: output, shape index: {}]
  %s5 = sld [smem:[#allocation0]]
  $region49: #{basic_block_forward.5} parent=0
    _
  %s7 = ssub.s32 1, %s5
  %s8 = scalar_select 0, %s7, %s5
  loop: start=0, step=1, limit=4
  $region2: #{basic_block_forward.5} parent=0 // loop_pre_header
    _
  $region3: #{basic_block_forward.5} parent=0 // loop_header
    %s10 = sphi 0, %s14
    %p11 = scmp.ge.s32.totalorder %s10, 4
    %s20 = sphi 0, %s22
    %s23 = sphi 0, %s20
    %s24 = sphi 0, %s23
    %s40 = sphi 0, %s24
    %s46 = sphi 0, %s48
    %s49 = sphi 0, %s46
    %s50 = sphi 0, %s49
    %s66 = sphi 0, %s50
    %s70 = sphi 0, %s70
    %s72 = sphi 0, %s70
    %s73 = sphi 0, %s72
    %s87 = sphi 0, %s73
    %s91 = sphi 0, %s91
    %s93 = sphi 0, %s91
    %s94 = sphi 0, %s93
    %s108 = sphi 0, %s94
    %s114 = sphi 0, %s116
    %s117 = sphi 0, %s114
    %s118 = sphi 0, %s117
    %s134 = sphi 0, %s118
  $region4: #{basic_block_forward.5} parent=0 // loop_header_branch
    %13 = sbr.rel (%p11) target = $region8
  $region5: #{basic_block_forward.5} parent=0 // loop_body
    %s15 = ssub.s32 %s10, 1
    %s16 = ssub.s32 %s10, 2
    %s17 = sadd.s32 %s10, 1
    %s18 = ssub.s32 %s10, %s17
    %p19 = scmp.eq.s32.totalorder %s18, 0
    %s21 = sadd.s32 %s20, 1
    %s22 = scalar_select %p19, %s20, %s21
    %p25 = pneg %p19
    %p26 = scmp.eq.s32.totalorder %s10, 1
    %p27 = por %p25, %p26
    %p28 = scmp.ne.s32.totalorder %s20, %s23
    %p29 = scmp.eq.s32.totalorder %s10, 0
    %p30 = por %p28, %p29
    %p31 = scmp.ne.s32.totalorder %s20, %s23
    %p32 = scmp.eq.s32.totalorder %s15, 1
    %p33 = por %p31, %p32
    %p34 = scmp.ne.s32.totalorder %s23, %s24
    %p35 = scmp.eq.s32.totalorder %s15, 0
    %p36 = por %p34, %p35
    %p37 = scmp.ne.s32.totalorder %s23, %s24
    %p38 = scmp.eq.s32.totalorder %s16, 1
    %p39 = por %p37, %p38
    %p41 = scmp.ne.s32.totalorder %s24, %s40
    %p42 = scmp.eq.s32.totalorder %s16, 0
    %p43 = por %p41, %p42
    %s44 = ssub.s32 %s10, %s17
    %p45 = scmp.eq.s32.totalorder %s44, 0
    %s47 = sadd.s32 %s46, 1
    %s48 = scalar_select %p45, %s46, %s47
    %p51 = pneg %p45
    %p52 = scmp.eq.s32.totalorder %s10, 1
    %p53 = por %p51, %p52
    %p54 = scmp.ne.s32.totalorder %s46, %s49
    %p55 = scmp.eq.s32.totalorder %s10, 0
    %p56 = por %p54, %p55
    %p57 = scmp.ne.s32.totalorder %s46, %s49
    %p58 = scmp.eq.s32.totalorder %s15, 1
    %p59 = por %p57, %p58
    %p60 = scmp.ne.s32.totalorder %s49, %s50
    %p61 = scmp.eq.s32.totalorder %s15, 0
    %p62 = por %p60, %p61
    %p63 = scmp.ne.s32.totalorder %s49, %s50
    %p64 = scmp.eq.s32.totalorder %s16, 1
    %p65 = por %p63, %p64
    %p67 = scmp.ne.s32.totalorder %s50, %s66
    %p68 = scmp.eq.s32.totalorder %s16, 0
    %p69 = por %p67, %p68
    %s71 = sadd.s32 %s70, 1
    %p74 = scmp.eq.s32.totalorder %s10, 1
    %p75 = scmp.ne.s32.totalorder %s70, %s72
    %p76 = scmp.eq.s32.totalorder %s10, 0
    %p77 = por %p75, %p76
    %p78 = scmp.ne.s32.totalorder %s70, %s72
    %p79 = scmp.eq.s32.totalorder %s15, 1
    %p80 = por %p78, %p79
    %p81 = scmp.ne.s32.totalorder %s72, %s73
    %p82 = scmp.eq.s32.totalorder %s15, 0
    %p83 = por %p81, %p82
    %p84 = scmp.ne.s32.totalorder %s72, %s73
    %p85 = scmp.eq.s32.totalorder %s16, 1
    %p86 = por %p84, %p85
    %p88 = scmp.ne.s32.totalorder %s73, %s87
    %p89 = scmp.eq.s32.totalorder %s16, 0
    %p90 = por %p88, %p89
    %s92 = sadd.s32 %s91, 1
    %p95 = scmp.eq.s32.totalorder %s10, 1
    %p96 = scmp.ne.s32.totalorder %s91, %s93
    %p97 = scmp.eq.s32.totalorder %s10, 0
    %p98 = por %p96, %p97
    %p99 = scmp.ne.s32.totalorder %s91, %s93
    %p100 = scmp.eq.s32.totalorder %s15, 1
    %p101 = por %p99, %p100
    %p102 = scmp.ne.s32.totalorder %s93, %s94
    %p103 = scmp.eq.s32.totalorder %s15, 0
    %p104 = por %p102, %p103
    %p105 = scmp.ne.s32.totalorder %s93, %s94
    %p106 = scmp.eq.s32.totalorder %s16, 1
    %p107 = por %p105, %p106
    %p109 = scmp.ne.s32.totalorder %s94, %s108
    %p110 = scmp.eq.s32.totalorder %s16, 0
    %p111 = por %p109, %p110
    %s112 = ssub.s32 %s10, %s17
    %p113 = scmp.eq.s32.totalorder %s112, 0
    %s115 = sadd.s32 %s114, 1
    %s116 = scalar_select %p113, %s114, %s115
    %p119 = pneg %p113
    %p120 = scmp.eq.s32.totalorder %s10, 1
    %p121 = por %p119, %p120
    %p122 = scmp.ne.s32.totalorder %s114, %s117
    %p123 = scmp.eq.s32.totalorder %s10, 0
    %p124 = por %p122, %p123
    %p125 = scmp.ne.s32.totalorder %s114, %s117
    %p126 = scmp.eq.s32.totalorder %s15, 1
    %p127 = por %p125, %p126
    %p128 = scmp.ne.s32.totalorder %s117, %s118
    %p129 = scmp.eq.s32.totalorder %s15, 0
    %p130 = por %p128, %p129
    %p131 = scmp.ne.s32.totalorder %s117, %s118
    %p132 = scmp.eq.s32.totalorder %s16, 1
    %p133 = por %p131, %p132
    %p135 = scmp.ne.s32.totalorder %s118, %s134
    %p136 = scmp.eq.s32.totalorder %s16, 0
    %p137 = por %p135, %p136
    %p138 = scmp.le.s32.totalorder 1, %s10
    %p139 = scmp.lt.s32.totalorder %s10, 3
    %p140 = pnand %p138, %p139
    %p141 = pneg %p140
    // Predicated region
    $region9: #{basic_block_forward.5} parent=5 // pred_check
      _
    $region10: #{basic_block_forward.5} parent=5 // pred_check_branch
      %143 = sbr.rel (%p140) target = $region12
    $region11: #{basic_block_forward.5} parent=5 // pred_region
      %s144 = ssub.s32 %s10, 1
      // Predicated region
      $region13: #{basic_block_forward.5} parent=11 // pred_check
        %p145 = pneg %p83
      $region14: #{basic_block_forward.5} parent=11 // pred_check_branch
        %147 = sbr.rel (%p145) target = $region16
      $region15: #{basic_block_forward.5} parent=11 // pred_region
        _
      $region16: #{basic_block_forward.5} parent=11 // pred_fallthru
        _
      // Predicated region
      $region17: #{basic_block_forward.5} parent=11 // pred_check
        %p148 = pneg %p104
      $region18: #{basic_block_forward.5} parent=11 // pred_check_branch
        %150 = sbr.rel (%p148) target = $region20
      $region19: #{basic_block_forward.5} parent=11 // pred_region
        _
      $region20: #{basic_block_forward.5} parent=11 // pred_fallthru
        _
    $region12: #{basic_block_forward.5} parent=5 // pred_fallthru
      _
    %p151 = scmp.lt.s32.totalorder %s10, 2
    // Predicated region
    $region21: #{basic_block_forward.5} parent=5 // pred_check
      %p152 = pneg %p151
    $region22: #{basic_block_forward.5} parent=5 // pred_check_branch
      %154 = sbr.rel (%p152) target = $region24
    $region23: #{basic_block_forward.5} parent=5 // pred_region
      // Predicated region
      $region25: #{basic_block_forward.5} parent=23 // pred_check
        %p155 = pneg %p30
      $region26: #{basic_block_forward.5} parent=23 // pred_check_branch
        %157 = sbr.rel (%p155) target = $region28
      $region27: #{basic_block_forward.5} parent=23 // pred_region
        %p158 = scmp.lt.s32.totalorder %s10, 1
        %s159 = scalar_select %p158, %s10, 1
        %s160 = smul.addr %s159, 2
        %s161 = smul.addr %s160, 8
        %s162 = scalar_lea.vmem %s0, %s161
      $region28: #{basic_block_forward.5} parent=23 // pred_fallthru
        _
      // Predicated region
      $region29: #{basic_block_forward.5} parent=23 // pred_check
        %p163 = pneg %p56
      $region30: #{basic_block_forward.5} parent=23 // pred_check_branch
        %165 = sbr.rel (%p163) target = $region32
      $region31: #{basic_block_forward.5} parent=23 // pred_region
        %p166 = scmp.lt.s32.totalorder %s10, 1
        %s167 = scalar_select %p166, %s10, 1
        %s168 = smul.addr %s167, 2
        %s169 = smul.addr %s168, 8
        %s170 = scalar_lea.vmem %s1, %s169
      $region32: #{basic_block_forward.5} parent=23 // pred_fallthru
        _
    $region24: #{basic_block_forward.5} parent=5 // pred_fallthru
      _
    %p171 = scmp.le.s32.totalorder 1, %s10
    %p172 = scmp.lt.s32.totalorder %s10, 3
    %p173 = pnand %p171, %p172
    %p174 = pneg %p173
    // Predicated region
    $region33: #{basic_block_forward.5} parent=5 // pred_check
      _
    $region34: #{basic_block_forward.5} parent=5 // pred_check_branch
      %176 = sbr.rel (%p173) target = $region36
    $region35: #{basic_block_forward.5} parent=5 // pred_region
      %s177 = ssub.s32 %s10, 1
      %p178 = scmp.lt.s32.totalorder %s15, 1
      %s179 = scalar_select %p178, %s15, 1
      %s180 = smul.addr %s179, 2
      %s181 = smul.addr %s180, 8
      %s182 = scalar_lea.vmem %s0, %s181
      %p183 = pneg %p36
      %p184 = pneg %p33
      %p185 = scmp.lt.s32.totalorder %s15, 1
      %s186 = scalar_select %p185, %s15, 1
      %s187 = smul.addr %s186, 2
      %s188 = smul.addr %s187, 8
      %s189 = scalar_lea.vmem %s1, %s188
      %p190 = pneg %p62
      %p191 = pneg %p59
      %p192 = pneg %p83
      %p193 = pneg %p80
      %p194 = pneg %p104
      %p195 = pneg %p101
      %p196 = pneg %p130
      %p197 = pneg %p127
      %p198 = scmp.lt.s32.totalorder %s15, 1
      %s199 = scalar_select %p198, %s15, 1
      %s200 = smul.addr %s199, 2
      %s201 = smul.addr %s200, 8
      %s202 = scalar_lea.vmem %s4, %s201
      %p203 = scmp.lt.s32.totalorder %s15, 1
      %s204 = scalar_select %p203, %s15, 1
      %s205 = smul.addr %s204, 2
      %s206 = smul.addr %s205, 8
      %s207 = scalar_lea.vmem %s0, %s206
      %p208 = scmp.lt.s32.totalorder %s15, 1
      %s209 = scalar_select %p208, %s15, 1
      %s210 = smul.addr %s209, 2
      %s211 = smul.addr %s210, 8
      %s212 = scalar_lea.vmem %s1, %s211
      %p213 = scmp.lt.s32.totalorder %s15, 1
      %s214 = scalar_select %p213, %s15, 1
      %s215 = smul.addr %s214, 2
      %s216 = smul.addr %s215, 8
      %s217 = scalar_lea.vmem %s4, %s216
      %v218 = vld [vmem:[%s207] sm:$0xff]
      %v219 = vld [vmem:[%s207 + $0x8] sm:$0xff]
      %v220 = vld [vmem:[%s212] sm:$0xff]
      %v221 = vld [vmem:[%s212 + $0x8] sm:$0xff]
      %v222 = vld [vmem:[%s2] sm:$0x1]
      %v224 = vlaneseq
      %v225 = vshrl.u32 %v224, 7
      %v226 = vsub.s32 0, %v225
      %v227 = vrot.slane %v222, %v226
      %v229 = vmul.f32 %v218, %v227
      %v230 = vmul.f32 %v219, %v227
      %v231 = vld [vmem:[%s3] sm:$0x1]
      %v233 = vlaneseq
      %v234 = vshrl.u32 %v233, 7
      %v235 = vsub.s32 0, %v234
      %v236 = vrot.slane %v231, %v235
      %v238 = vadd.f32 %v229, %v236
      %v239 = vadd.f32 %v230, %v236
      %v240 = vadd.f32 %v238, %v220
      %v241 = vadd.f32 %v239, %v221
      %vm242 = vcmp.ge.f32.partialorder %v240, 0.0
      %vm243 = vcmp.ge.f32.partialorder %v241, 0.0
      %v244 = vmul.f32 %v240, 0.01
      %v245 = vmul.f32 %v241, 0.01
      %v246 = vsel %vm242, %v240, %v244
      %v247 = vsel %vm243, %v241, %v245
      %vm248 = vcmask 64512
      %249 = vst.msk [vmem:[%s217] sm:$0xff] %vm248, %v246
      %250 = vst.msk [vmem:[%s217 + $0x8] sm:$0xff] %vm248, %v247
      %p251 = scmp.lt.s32.totalorder %s15, 1
      %s252 = scalar_select %p251, %s15, 1
      %s253 = smul.addr %s252, 2
      %s254 = smul.addr %s253, 8
      %s255 = scalar_lea.vmem %s4, %s254
      // Predicated region
      $region37: #{basic_block_forward.5} parent=35 // pred_check
        %p256 = pneg %p127
      $region38: #{basic_block_forward.5} parent=35 // pred_check_branch
        %258 = sbr.rel (%p256) target = $region40
      $region39: #{basic_block_forward.5} parent=35 // pred_region
        _
      $region40: #{basic_block_forward.5} parent=35 // pred_fallthru
        _
    $region36: #{basic_block_forward.5} parent=5 // pred_fallthru
      _
    %p259 = scmp.le.s32.totalorder 2, %s10
    // Predicated region
    $region41: #{basic_block_forward.5} parent=5 // pred_check
      %p260 = pneg %p259
    $region42: #{basic_block_forward.5} parent=5 // pred_check_branch
      %262 = sbr.rel (%p260) target = $region44
    $region43: #{basic_block_forward.5} parent=5 // pred_region
      %s263 = ssub.s32 %s10, 2
      // Predicated region
      $region45: #{basic_block_forward.5} parent=43 // pred_check
        %p264 = pneg %p133
      $region46: #{basic_block_forward.5} parent=43 // pred_check_branch
        %266 = sbr.rel (%p264) target = $region48
      $region47: #{basic_block_forward.5} parent=43 // pred_region
        %p267 = scmp.lt.s32.totalorder %s16, 1
        %s268 = scalar_select %p267, %s16, 1
        %s269 = smul.addr %s268, 2
        %s270 = smul.addr %s269, 8
        %s271 = scalar_lea.vmem %s4, %s270
      $region48: #{basic_block_forward.5} parent=43 // pred_fallthru
        _
    $region44: #{basic_block_forward.5} parent=5 // pred_fallthru
      _
  $region6: #{basic_block_forward.5} parent=0 // loop_footer
    %s14 = sadd.s32 1, %s10
  $region7: #{basic_block_forward.5} parent=0 // loop_footer_branch
    %9 = sbr.rel target = $region3
  $region8: #{basic_block_forward.5} parent=0 // loop_exit
    _

// kernel: basic_block_forward.3
$region0: #{basic_block_forward.3}
  #allocation0 [shape = 'u32[]', space=smem, size = 0x4, offset = 0x4, fixed_abs, tag = 'smem constant byte address 0x4 - core index']
  #allocation1 [shape = 'u32[144,128]{1,0:T(1,128)}', space=vmem, size = 0x12000, scoped, tag = 'internal scratch']
  %s0 = inlined_call_operand.vmem [shape: f32[2,32,8], index: 0, kind: input, shape index: {}]
  %s1 = inlined_call_operand.vmem [shape: f32[3,8,8], index: 1, kind: input, shape index: {}]
  %s2 = inlined_call_operand.vmem [shape: f32[1,8], index: 2, kind: input, shape index: {}]
  %s3 = inlined_call_operand.vmem [shape: f32[2,32,8], index: 3, kind: output, shape index: {0}]
  %s4 = inlined_call_operand.vmem [shape: f32[2,2,8], index: 4, kind: output, shape index: {1}]
  %5 = xla_tuple %s3, %s4
  %s6 = sld [smem:[#allocation0]]
  $region53: #{basic_block_forward.3} parent=0
    _
  %s8 = ssub.s32 1, %s6
  %s9 = scalar_select 0, %s8, %s6
  loop: start=0, step=1, limit=4
  $region2: #{basic_block_forward.3} parent=0 // loop_pre_header
    _
  $region3: #{basic_block_forward.3} parent=0 // loop_header
    %s11 = sphi 0, %s15
    %p12 = scmp.ge.s32.totalorder %s11, 4
    %s21 = sphi 0, %s23
    %s24 = sphi 0, %s21
    %s25 = sphi 0, %s24
    %s41 = sphi 0, %s25
    %s45 = sphi 0, %s45
    %s47 = sphi 0, %s45
    %s48 = sphi 0, %s47
    %s62 = sphi 0, %s48
    %s66 = sphi 0, %s66
    %s68 = sphi 0, %s66
    %s69 = sphi 0, %s68
    %s83 = sphi 0, %s69
    %s89 = sphi 0, %s91
    %s92 = sphi 0, %s89
    %s93 = sphi 0, %s92
    %s109 = sphi 0, %s93
    %s115 = sphi 0, %s117
    %s118 = sphi 0, %s115
    %s119 = sphi 0, %s118
    %s135 = sphi 0, %s119
  $region4: #{basic_block_forward.3} parent=0 // loop_header_branch
    %14 = sbr.rel (%p12) target = $region8
  $region5: #{basic_block_forward.3} parent=0 // loop_body
    %s16 = ssub.s32 %s11, 1
    %s17 = ssub.s32 %s11, 2
    %s18 = sadd.s32 %s11, 1
    %s19 = ssub.s32 %s11, %s18
    %p20 = scmp.eq.s32.totalorder %s19, 0
    %s22 = sadd.s32 %s21, 1
    %s23 = scalar_select %p20, %s21, %s22
    %p26 = pneg %p20
    %p27 = scmp.eq.s32.totalorder %s11, 1
    %p28 = por %p26, %p27
    %p29 = scmp.ne.s32.totalorder %s21, %s24
    %p30 = scmp.eq.s32.totalorder %s11, 0
    %p31 = por %p29, %p30
    %p32 = scmp.ne.s32.totalorder %s21, %s24
    %p33 = scmp.eq.s32.totalorder %s16, 1
    %p34 = por %p32, %p33
    %p35 = scmp.ne.s32.totalorder %s24, %s25
    %p36 = scmp.eq.s32.totalorder %s16, 0
    %p37 = por %p35, %p36
    %p38 = scmp.ne.s32.totalorder %s24, %s25
    %p39 = scmp.eq.s32.totalorder %s17, 1
    %p40 = por %p38, %p39
    %p42 = scmp.ne.s32.totalorder %s25, %s41
    %p43 = scmp.eq.s32.totalorder %s17, 0
    %p44 = por %p42, %p43
    %s46 = sadd.s32 %s45, 1
    %p49 = scmp.eq.s32.totalorder %s11, 1
    %p50 = scmp.ne.s32.totalorder %s45, %s47
    %p51 = scmp.eq.s32.totalorder %s11, 0
    %p52 = por %p50, %p51
    %p53 = scmp.ne.s32.totalorder %s45, %s47
    %p54 = scmp.eq.s32.totalorder %s16, 1
    %p55 = por %p53, %p54
    %p56 = scmp.ne.s32.totalorder %s47, %s48
    %p57 = scmp.eq.s32.totalorder %s16, 0
    %p58 = por %p56, %p57
    %p59 = scmp.ne.s32.totalorder %s47, %s48
    %p60 = scmp.eq.s32.totalorder %s17, 1
    %p61 = por %p59, %p60
    %p63 = scmp.ne.s32.totalorder %s48, %s62
    %p64 = scmp.eq.s32.totalorder %s17, 0
    %p65 = por %p63, %p64
    %s67 = sadd.s32 %s66, 1
    %p70 = scmp.eq.s32.totalorder %s11, 1
    %p71 = scmp.ne.s32.totalorder %s66, %s68
    %p72 = scmp.eq.s32.totalorder %s11, 0
    %p73 = por %p71, %p72
    %p74 = scmp.ne.s32.totalorder %s66, %s68
    %p75 = scmp.eq.s32.totalorder %s16, 1
    %p76 = por %p74, %p75
    %p77 = scmp.ne.s32.totalorder %s68, %s69
    %p78 = scmp.eq.s32.totalorder %s16, 0
    %p79 = por %p77, %p78
    %p80 = scmp.ne.s32.totalorder %s68, %s69
    %p81 = scmp.eq.s32.totalorder %s17, 1
    %p82 = por %p80, %p81
    %p84 = scmp.ne.s32.totalorder %s69, %s83
    %p85 = scmp.eq.s32.totalorder %s17, 0
    %p86 = por %p84, %p85
    %s87 = ssub.s32 %s11, %s18
    %p88 = scmp.eq.s32.totalorder %s87, 0
    %s90 = sadd.s32 %s89, 1
    %s91 = scalar_select %p88, %s89, %s90
    %p94 = pneg %p88
    %p95 = scmp.eq.s32.totalorder %s11, 1
    %p96 = por %p94, %p95
    %p97 = scmp.ne.s32.totalorder %s89, %s92
    %p98 = scmp.eq.s32.totalorder %s11, 0
    %p99 = por %p97, %p98
    %p100 = scmp.ne.s32.totalorder %s89, %s92
    %p101 = scmp.eq.s32.totalorder %s16, 1
    %p102 = por %p100, %p101
    %p103 = scmp.ne.s32.totalorder %s92, %s93
    %p104 = scmp.eq.s32.totalorder %s16, 0
    %p105 = por %p103, %p104
    %p106 = scmp.ne.s32.totalorder %s92, %s93
    %p107 = scmp.eq.s32.totalorder %s17, 1
    %p108 = por %p106, %p107
    %p110 = scmp.ne.s32.totalorder %s93, %s109
    %p111 = scmp.eq.s32.totalorder %s17, 0
    %p112 = por %p110, %p111
    %s113 = ssub.s32 %s11, %s18
    %p114 = scmp.eq.s32.totalorder %s113, 0
    %s116 = sadd.s32 %s115, 1
    %s117 = scalar_select %p114, %s115, %s116
    %p120 = pneg %p114
    %p121 = scmp.eq.s32.totalorder %s11, 1
    %p122 = por %p120, %p121
    %p123 = scmp.ne.s32.totalorder %s115, %s118
    %p124 = scmp.eq.s32.totalorder %s11, 0
    %p125 = por %p123, %p124
    %p126 = scmp.ne.s32.totalorder %s115, %s118
    %p127 = scmp.eq.s32.totalorder %s16, 1
    %p128 = por %p126, %p127
    %p129 = scmp.ne.s32.totalorder %s118, %s119
    %p130 = scmp.eq.s32.totalorder %s16, 0
    %p131 = por %p129, %p130
    %p132 = scmp.ne.s32.totalorder %s118, %s119
    %p133 = scmp.eq.s32.totalorder %s17, 1
    %p134 = por %p132, %p133
    %p136 = scmp.ne.s32.totalorder %s119, %s135
    %p137 = scmp.eq.s32.totalorder %s17, 0
    %p138 = por %p136, %p137
    %p139 = scmp.le.s32.totalorder 1, %s11
    %p140 = scmp.lt.s32.totalorder %s11, 3
    %p141 = pnand %p139, %p140
    %p142 = pneg %p141
    // Predicated region
    $region9: #{basic_block_forward.3} parent=5 // pred_check
      _
    $region10: #{basic_block_forward.3} parent=5 // pred_check_branch
      %144 = sbr.rel (%p141) target = $region12
    $region11: #{basic_block_forward.3} parent=5 // pred_region
      %s145 = ssub.s32 %s11, 1
      // Predicated region
      $region13: #{basic_block_forward.3} parent=11 // pred_check
        %p146 = pneg %p58
      $region14: #{basic_block_forward.3} parent=11 // pred_check_branch
        %148 = sbr.rel (%p146) target = $region16
      $region15: #{basic_block_forward.3} parent=11 // pred_region
        _
      $region16: #{basic_block_forward.3} parent=11 // pred_fallthru
        _
      // Predicated region
      $region17: #{basic_block_forward.3} parent=11 // pred_check
        %p149 = pneg %p79
      $region18: #{basic_block_forward.3} parent=11 // pred_check_branch
        %151 = sbr.rel (%p149) target = $region20
      $region19: #{basic_block_forward.3} parent=11 // pred_region
        _
      $region20: #{basic_block_forward.3} parent=11 // pred_fallthru
        _
    $region12: #{basic_block_forward.3} parent=5 // pred_fallthru
      _
    %p152 = scmp.lt.s32.totalorder %s11, 2
    // Predicated region
    $region21: #{basic_block_forward.3} parent=5 // pred_check
      %p153 = pneg %p152
    $region22: #{basic_block_forward.3} parent=5 // pred_check_branch
      %155 = sbr.rel (%p153) target = $region24
    $region23: #{basic_block_forward.3} parent=5 // pred_region
      // Predicated region
      $region25: #{basic_block_forward.3} parent=23 // pred_check
        %p156 = pneg %p31
      $region26: #{basic_block_forward.3} parent=23 // pred_check_branch
        %158 = sbr.rel (%p156) target = $region28
      $region27: #{basic_block_forward.3} parent=23 // pred_region
        %p159 = scmp.lt.s32.totalorder %s11, 1
        %s160 = scalar_select %p159, %s11, 1
        %s161 = smul.addr %s160, 4
        %s162 = smul.addr %s161, 8
        %s163 = scalar_lea.vmem %s0, %s162
      $region28: #{basic_block_forward.3} parent=23 // pred_fallthru
        _
    $region24: #{basic_block_forward.3} parent=5 // pred_fallthru
      _
    %p164 = scmp.le.s32.totalorder 1, %s11
    %p165 = scmp.lt.s32.totalorder %s11, 3
    %p166 = pnand %p164, %p165
    %p167 = pneg %p166
    // Predicated region
    $region29: #{basic_block_forward.3} parent=5 // pred_check
      _
    $region30: #{basic_block_forward.3} parent=5 // pred_check_branch
      %169 = sbr.rel (%p166) target = $region32
    $region31: #{basic_block_forward.3} parent=5 // pred_region
      %s170 = ssub.s32 %s11, 1
      %p171 = scmp.lt.s32.totalorder %s16, 1
      %s172 = scalar_select %p171, %s16, 1
      %s173 = smul.addr %s172, 4
      %s174 = smul.addr %s173, 8
      %s175 = scalar_lea.vmem %s0, %s174
      %p176 = pneg %p37
      %p177 = pneg %p34
      %p178 = pneg %p58
      %p179 = pneg %p55
      %p180 = pneg %p79
      %p181 = pneg %p76
      %p182 = pneg %p105
      %p183 = pneg %p102
      %p184 = scmp.lt.s32.totalorder %s16, 1
      %s185 = scalar_select %p184, %s16, 1
      %s186 = smul.addr %s185, 4
      %s187 = smul.addr %s186, 8
      %s188 = scalar_lea.vmem %s3, %s187
      %p189 = pneg %p131
      %p190 = pneg %p128
      %p191 = scmp.lt.s32.totalorder %s16, 1
      %s192 = scalar_select %p191, %s16, 1
      %s193 = smul.addr %s192, 2
      %s194 = scalar_lea.vmem %s4, %s193
      %p195 = scmp.lt.s32.totalorder %s16, 1
      %s196 = scalar_select %p195, %s16, 1
      %s197 = smul.addr %s196, 4
      %s198 = smul.addr %s197, 8
      %s199 = scalar_lea.vmem %s0, %s198
      %p200 = scmp.lt.s32.totalorder %s16, 1
      %s201 = scalar_select %p200, %s16, 1
      %s202 = smul.addr %s201, 4
      %s203 = smul.addr %s202, 8
      %s204 = scalar_lea.vmem %s3, %s203
      %p205 = scmp.lt.s32.totalorder %s16, 1
      %s206 = scalar_select %p205, %s16, 1
      %s207 = smul.addr %s206, 2
      %s208 = scalar_lea.vmem %s4, %s207
      %v209 = vld [vmem:[%s199] sm:$0xff]
      %v210 = vld [vmem:[%s199 + $0x8] sm:$0xff]
      %v211 = vld [vmem:[%s199 + $0x10] sm:$0xff]
      %v212 = vld [vmem:[%s199 + $0x18] sm:$0xff]
      %v213 = vld [vmem:[%s2] sm:$0x1]
      %v214 = vld [vmem:[%s1] sm:$0xff]
      %s215 = scalar_lea.vmem %s1, 8
      %v216 = vld [vmem:[%s215] sm:$0xff]
      %vm217 = vcmask 64512
      %v219 = vsel %vm217, %v210, 0
      %v222 = vsel %vm217, %v211, 0
      %224 = vmatprep.subr.mxu0 0.0
      %225 = vmatpush1.msra.mxu0 %v216
      %226 = vmatprep.subr.mxu0 0.0
      %227 = vmatpush1.msra.mxu0 0.0
      %228 = vmatprep.subr.mxu0 0.0
      %229 = vmatpush1.msra.mxu0 0.0
      %230 = vmatprep.subr.mxu0 0.0
      %231 = vmatpush1.msra.mxu0 0.0
      %232 = vmatprep.subr.mxu0 0.0
      %233 = vmatpush1.msra.mxu0 0.0
      %234 = vmatprep.subr.mxu0 0.0
      %235 = vmatpush1.msra.mxu0 0.0
      %236 = vmatprep.subr.mxu0 0.0
      %237 = vmatpush1.msra.mxu0 0.0
      %238 = vmatprep.subr.mxu0 0.0
      %239 = vmatpush1.msra.mxu0 0.0
      %240 = vmatprep.subr.mxu0 0.0
      %241 = vmatpush1.msra.mxu0 0.0
      %242 = vmatprep.subr.mxu0 0.0
      %243 = vmatpush1.msra.mxu0 0.0
      %244 = vmatprep.subr.mxu0 0.0
      %245 = vmatpush1.msra.mxu0 0.0
      %246 = vmatprep.subr.mxu0 0.0
      %247 = vmatpush1.msra.mxu0 0.0
      %248 = vmatprep.subr.mxu0 0.0
      %249 = vmatpush1.msra.mxu0 0.0
      %250 = vmatprep.subr.mxu0 0.0
      %251 = vmatpush1.msra.mxu0 0.0
      %252 = vmatprep.subr.mxu0 0.0
      %253 = vmatpush1.msra.mxu0 0.0
      %254 = vmatprep.subr.mxu0 0.0
      %255 = vmatpush1.msra.mxu0 0.0
      %256 = vmatprep.subr.mxu0 0.0
      %257 = vmatpush1.msra.mxu0 0.0
      %258 = vmatprep.subr.mxu0 0.0
      %259 = vmatpush1.msra.mxu0 0.0
      %260 = vmatprep.subr.mxu0 0.0
      %261 = vmatpush1.msra.mxu0 0.0
      %262 = vmatprep.subr.mxu0 0.0
      %263 = vmatpush1.msra.mxu0 0.0
      %264 = vmatprep.subr.mxu0 0.0
      %265 = vmatpush1.msra.mxu0 0.0
      %266 = vmatprep.subr.mxu0 0.0
      %267 = vmatpush1.msra.mxu0 0.0
      %268 = vmatprep.subr.mxu0 0.0
      %269 = vmatpush1.msra.mxu0 0.0
      %270 = vmatprep.subr.mxu0 0.0
      %271 = vmatpush1.msra.mxu0 0.0
      %272 = vmatprep.subr.mxu0 0.0
      %273 = vmatpush1.msra.mxu0 0.0
      %274 = vmatprep.subr.mxu0 0.0
      %275 = vmatpush1.msra.mxu0 0.0
      %276 = vmatprep.subr.mxu0 0.0
      %277 = vmatpush1.msra.mxu0 0.0
      %278 = vmatprep.subr.mxu0 0.0
      %279 = vmatpush1.msra.mxu0 0.0
      %280 = vmatprep.subr.mxu0 0.0
      %281 = vmatpush1.msra.mxu0 0.0
      %282 = vmatprep.subr.mxu0 0.0
      %283 = vmatpush1.msra.mxu0 0.0
      %284 = vmatprep.subr.mxu0 0.0
      %285 = vmatpush1.msra.mxu0 0.0
      %286 = vmatprep.subr.mxu0 0.0
      %287 = vmatpush1.msra.mxu0 0.0
      %288 = vmatprep.mubr.f32.mxu0 0.0
      %289 = vmatmul.mubr.f32.gmra.mrb[0].mxu0 %v219
      %v290 = vpop.f32.mrb[0].mxu0
      %v291 = vadd.f32 0.0, %v290
      %v292 = vpop.f32.mrb[0].mxu0
      %293 = vmatprep.mubr.f32.mxu0 0.0
      %294 = vmatmul.mubr.f32.gmra.mrb[0].mxu0 %v222
      %v295 = vpop.f32.mrb[0].mxu0
      %v296 = vadd.f32 0.0, %v295
      %v297 = vpop.f32.mrb[0].mxu0
      %298 = vdwg.mxu0
      %vm300 = vcmask 1040384
      %v301 = vrot.slane %v209, 7
      %v302 = vrot.slane %v210, 7
      %v303 = vsel %vm300, %v301, %v302
      %v304 = vrot.slane %v211, 7
      %v305 = vsel %vm300, %v302, %v304
      %v306 = vsel %vm217, %v303, 0
      %v308 = vsel %vm217, %v305, 0
      %310 = vmatprep.subr.mxu0 0.0
      %311 = vmatpush1.msra.mxu0 %v214
      %312 = vmatprep.subr.mxu0 0.0
      %313 = vmatpush1.msra.mxu0 0.0
      %314 = vmatprep.subr.mxu0 0.0
      %315 = vmatpush1.msra.mxu0 0.0
      %316 = vmatprep.subr.mxu0 0.0
      %317 = vmatpush1.msra.mxu0 0.0
      %318 = vmatprep.subr.mxu0 0.0
      %319 = vmatpush1.msra.mxu0 0.0
      %320 = vmatprep.subr.mxu0 0.0
      %321 = vmatpush1.msra.mxu0 0.0
      %322 = vmatprep.subr.mxu0 0.0
      %323 = vmatpush1.msra.mxu0 0.0
      %324 = vmatprep.subr.mxu0 0.0
      %325 = vmatpush1.msra.mxu0 0.0
      %326 = vmatprep.subr.mxu0 0.0
      %327 = vmatpush1.msra.mxu0 0.0
      %328 = vmatprep.subr.mxu0 0.0
      %329 = vmatpush1.msra.mxu0 0.0
      %330 = vmatprep.subr.mxu0 0.0
      %331 = vmatpush1.msra.mxu0 0.0
      %332 = vmatprep.subr.mxu0 0.0
      %333 = vmatpush1.msra.mxu0 0.0
      %334 = vmatprep.subr.mxu0 0.0
      %335 = vmatpush1.msra.mxu0 0.0
      %336 = vmatprep.subr.mxu0 0.0
      %337 = vmatpush1.msra.mxu0 0.0
      %338 = vmatprep.subr.mxu0 0.0
      %339 = vmatpush1.msra.mxu0 0.0
      %340 = vmatprep.subr.mxu0 0.0
      %341 = vmatpush1.msra.mxu0 0.0
      %342 = vmatprep.subr.mxu0 0.0
      %343 = vmatpush1.msra.mxu0 0.0
      %344 = vmatprep.subr.mxu0 0.0
      %345 = vmatpush1.msra.mxu0 0.0
      %346 = vmatprep.subr.mxu0 0.0
      %347 = vmatpush1.msra.mxu0 0.0
      %348 = vmatprep.subr.mxu0 0.0
      %349 = vmatpush1.msra.mxu0 0.0
      %350 = vmatprep.subr.mxu0 0.0
      %351 = vmatpush1.msra.mxu0 0.0
      %352 = vmatprep.subr.mxu0 0.0
      %353 = vmatpush1.msra.mxu0 0.0
      %354 = vmatprep.subr.mxu0 0.0
      %355 = vmatpush1.msra.mxu0 0.0
      %356 = vmatprep.subr.mxu0 0.0
      %357 = vmatpush1.msra.mxu0 0.0
      %358 = vmatprep.subr.mxu0 0.0
      %359 = vmatpush1.msra.mxu0 0.0
      %360 = vmatprep.subr.mxu0 0.0
      %361 = vmatpush1.msra.mxu0 0.0
      %362 = vmatprep.subr.mxu0 0.0
      %363 = vmatpush1.msra.mxu0 0.0
      %364 = vmatprep.subr.mxu0 0.0
      %365 = vmatpush1.msra.mxu0 0.0
      %366 = vmatprep.subr.mxu0 0.0
      %367 = vmatpush1.msra.mxu0 0.0
      %368 = vmatprep.subr.mxu0 0.0
      %369 = vmatpush1.msra.mxu0 0.0
      %370 = vmatprep.subr.mxu0 0.0
      %371 = vmatpush1.msra.mxu0 0.0
      %372 = vmatprep.subr.mxu0 0.0
      %373 = vmatpush1.msra.mxu0 0.0
      %374 = vmatprep.mubr.f32.mxu0 0.0
      %375 = vmatmul.mubr.f32.gmra.mrb[0].mxu0 %v306
      %v376 = vpop.f32.mrb[0].mxu0
      %v377 = vadd.f32 %v291, %v376
      %v378 = vpop.f32.mrb[0].mxu0
      %379 = vmatprep.mubr.f32.mxu0 0.0
      %380 = vmatmul.mubr.f32.gmra.mrb[0].mxu0 %v308
      %v381 = vpop.f32.mrb[0].mxu0
      %v382 = vadd.f32 %v296, %v381
      %v383 = vpop.f32.mrb[0].mxu0
      %384 = vdwg.mxu0
      %s385 = scalar_lea.vmem %s1, 16
      %v386 = vld [vmem:[%s385] sm:$0xff]
      %vm388 = vcmask 1046528
      %v389 = vrot.slane %v210, 1
      %v390 = vrot.slane %v211, 1
      %v391 = vsel %vm388, %v389, %v390
      %v392 = vrot.slane %v212, 1
      %v393 = vsel %vm388, %v390, %v392
      %v394 = vsel %vm217, %v391, 0
      %v396 = vsel %vm217, %v393, 0
      %398 = vmatprep.subr.mxu0 0.0
      %399 = vmatpush1.msra.mxu0 %v386
      %400 = vmatprep.subr.mxu0 0.0
      %401 = vmatpush1.msra.mxu0 0.0
      %402 = vmatprep.subr.mxu0 0.0
      %403 = vmatpush1.msra.mxu0 0.0
      %404 = vmatprep.subr.mxu0 0.0
      %405 = vmatpush1.msra.mxu0 0.0
      %406 = vmatprep.subr.mxu0 0.0
      %407 = vmatpush1.msra.mxu0 0.0
      %408 = vmatprep.subr.mxu0 0.0
      %409 = vmatpush1.msra.mxu0 0.0
      %410 = vmatprep.subr.mxu0 0.0
      %411 = vmatpush1.msra.mxu0 0.0
      %412 = vmatprep.subr.mxu0 0.0
      %413 = vmatpush1.msra.mxu0 0.0
      %414 = vmatprep.subr.mxu0 0.0
      %415 = vmatpush1.msra.mxu0 0.0
      %416 = vmatprep.subr.mxu0 0.0
      %417 = vmatpush1.msra.mxu0 0.0
      %418 = vmatprep.subr.mxu0 0.0
      %419 = vmatpush1.msra.mxu0 0.0
      %420 = vmatprep.subr.mxu0 0.0
      %421 = vmatpush1.msra.mxu0 0.0
      %422 = vmatprep.subr.mxu0 0.0
      %423 = vmatpush1.msra.mxu0 0.0
      %424 = vmatprep.subr.mxu0 0.0
      %425 = vmatpush1.msra.mxu0 0.0
      %426 = vmatprep.subr.mxu0 0.0
      %427 = vmatpush1.msra.mxu0 0.0
      %428 = vmatprep.subr.mxu0 0.0
      %429 = vmatpush1.msra.mxu0 0.0
      %430 = vmatprep.subr.mxu0 0.0
      %431 = vmatpush1.msra.mxu0 0.0
      %432 = vmatprep.subr.mxu0 0.0
      %433 = vmatpush1.msra.mxu0 0.0
      %434 = vmatprep.subr.mxu0 0.0
      %435 = vmatpush1.msra.mxu0 0.0
      %436 = vmatprep.subr.mxu0 0.0
      %437 = vmatpush1.msra.mxu0 0.0
      %438 = vmatprep.subr.mxu0 0.0
      %439 = vmatpush1.msra.mxu0 0.0
      %440 = vmatprep.subr.mxu0 0.0
      %441 = vmatpush1.msra.mxu0 0.0
      %442 = vmatprep.subr.mxu0 0.0
      %443 = vmatpush1.msra.mxu0 0.0
      %444 = vmatprep.subr.mxu0 0.0
      %445 = vmatpush1.msra.mxu0 0.0
      %446 = vmatprep.subr.mxu0 0.0
      %447 = vmatpush1.msra.mxu0 0.0
      %448 = vmatprep.subr.mxu0 0.0
      %449 = vmatpush1.msra.mxu0 0.0
      %450 = vmatprep.subr.mxu0 0.0
      %451 = vmatpush1.msra.mxu0 0.0
      %452 = vmatprep.subr.mxu0 0.0
      %453 = vmatpush1.msra.mxu0 0.0
      %454 = vmatprep.subr.mxu0 0.0
      %455 = vmatpush1.msra.mxu0 0.0
      %456 = vmatprep.subr.mxu0 0.0
      %457 = vmatpush1.msra.mxu0 0.0
      %458 = vmatprep.subr.mxu0 0.0
      %459 = vmatpush1.msra.mxu0 0.0
      %460 = vmatprep.subr.mxu0 0.0
      %461 = vmatpush1.msra.mxu0 0.0
      %462 = vmatprep.mubr.f32.mxu0 0.0
      %463 = vmatmul.mubr.f32.gmra.mrb[0].mxu0 %v394
      %v464 = vpop.f32.mrb[0].mxu0
      %v465 = vadd.f32 0.0, %v464
      %v466 = vpop.f32.mrb[0].mxu0
      %467 = vmatprep.mubr.f32.mxu0 0.0
      %468 = vmatmul.mubr.f32.gmra.mrb[0].mxu0 %v396
      %v469 = vpop.f32.mrb[0].mxu0
      %v470 = vadd.f32 0.0, %v469
      %v471 = vpop.f32.mrb[0].mxu0
      %472 = vdwg.mxu0
      %v473 = vadd.f32 %v377, %v465
      %v474 = vadd.f32 %v382, %v470
      %v476 = vlaneseq
      %v477 = vshrl.u32 %v476, 7
      %v478 = vsub.s32 0, %v477
      %v479 = vrot.slane %v213, %v478
      %v481 = vadd.f32 %v473, %v479
      %v482 = vadd.f32 %v474, %v479
      %v483 = vsel %vm217, %v481, 0.0
      %v484 = vsel %vm217, %v482, 0.0
      %v485 = vadd.f32 %v483, %v484
      %v486 = vrot.slane %v485, 4
      %v487 = vadd.f32 %v485, %v486
      %v488 = vrot.slane %v487, 2
      %v489 = vadd.f32 %v487, %v488
      %v490 = vrot.slane %v489, 1
      %v491 = vadd.f32 %v489, %v490
      %v492 = vrcp.pop 16.0
      %v493 = vmul.f32 %v491, %v492
      %v494 = vsub.f32 %v481, %v493
      %v495 = vsub.f32 %v482, %v493
      %v496 = vmul.f32 %v494, %v494
      %v497 = vmul.f32 %v495, %v495
      %v498 = vsel %vm217, %v496, 0.0
      %v499 = vsel %vm217, %v497, 0.0
      %v500 = vadd.f32 %v498, %v499
      %v501 = vrot.slane %v500, 4
      %v502 = vadd.f32 %v500, %v501
      %v503 = vrot.slane %v502, 2
      %v504 = vadd.f32 %v502, %v503
      %v505 = vrot.slane %v504, 1
      %v506 = vadd.f32 %v504, %v505
      %vm507 = vcmask 57344
      %508 = vst.msk [vmem:[%s208] sm:$0x1] %vm507, %v493
      %509 = vst.msk [vmem:[%s208 + $0x1] sm:$0x1] %vm507, %v506
      %510 = vst.msk [vmem:[%s204] sm:$0xff] %vm217, 0.0
      %511 = vst.msk [vmem:[%s204 + $0x18] sm:$0xff] %vm217, 0.0
      %512 = vst.msk [vmem:[%s204 + $0x8] sm:$0xff] %vm217, %v481
      %513 = vst.msk [vmem:[%s204 + $0x10] sm:$0xff] %vm217, %v482
      %p514 = scmp.lt.s32.totalorder %s16, 1
      %s515 = scalar_select %p514, %s16, 1
      %s516 = smul.addr %s515, 4
      %s517 = smul.addr %s516, 8
      %s518 = scalar_lea.vmem %s3, %s517
      %p519 = scmp.lt.s32.totalorder %s16, 1
      %s520 = scalar_select %p519, %s16, 1
      %s521 = smul.addr %s520, 2
      %s522 = scalar_lea.vmem %s4, %s521
      // Predicated region
      $region33: #{basic_block_forward.3} parent=31 // pred_check
        %p523 = pneg %p102
      $region34: #{basic_block_forward.3} parent=31 // pred_check_branch
        %525 = sbr.rel (%p523) target = $region36
      $region35: #{basic_block_forward.3} parent=31 // pred_region
        _
      $region36: #{basic_block_forward.3} parent=31 // pred_fallthru
        _
      // Predicated region
      $region37: #{basic_block_forward.3} parent=31 // pred_check
        %p526 = pneg %p128
      $region38: #{basic_block_forward.3} parent=31 // pred_check_branch
        %528 = sbr.rel (%p526) target = $region40
      $region39: #{basic_block_forward.3} parent=31 // pred_region
        _
      $region40: #{basic_block_forward.3} parent=31 // pred_fallthru
        _
    $region32: #{basic_block_forward.3} parent=5 // pred_fallthru
      _
    %p529 = scmp.le.s32.totalorder 2, %s11
    // Predicated region
    $region41: #{basic_block_forward.3} parent=5 // pred_check
      %p530 = pneg %p529
    $region42: #{basic_block_forward.3} parent=5 // pred_check_branch
      %532 = sbr.rel (%p530) target = $region44
    $region43: #{basic_block_forward.3} parent=5 // pred_region
      %s533 = ssub.s32 %s11, 2
      // Predicated region
      $region45: #{basic_block_forward.3} parent=43 // pred_check
        %p534 = pneg %p108
      $region46: #{basic_block_forward.3} parent=43 // pred_check_branch
        %536 = sbr.rel (%p534) target = $region48
      $region47: #{basic_block_forward.3} parent=43 // pred_region
        %p537 = scmp.lt.s32.totalorder %s17, 1
        %s538 = scalar_select %p537, %s17, 1
        %s539 = smul.addr %s538, 4
        %s540 = smul.addr %s539, 8
        %s541 = scalar_lea.vmem %s3, %s540
      $region48: #{basic_block_forward.3} parent=43 // pred_fallthru
        _
      // Predicated region
      $region49: #{basic_block_forward.3} parent=43 // pred_check
        %p542 = pneg %p134
      $region50: #{basic_block_forward.3} parent=43 // pred_check_branch
        %544 = sbr.rel (%p542) target = $region52
      $region51: #{basic_block_forward.3} parent=43 // pred_region
        %p545 = scmp.lt.s32.totalorder %s17, 1
        %s546 = scalar_select %p545, %s17, 1
        %s547 = smul.addr %s546, 2
        %s548 = scalar_lea.vmem %s4, %s547
      $region52: #{basic_block_forward.3} parent=43 // pred_fallthru
        _
    $region44: #{basic_block_forward.3} parent=5 // pred_fallthru
      _
  $region6: #{basic_block_forward.3} parent=0 // loop_footer
    %s15 = sadd.s32 1, %s11
  $region7: #{basic_block_forward.3} parent=0 // loop_footer_branch
    %10 = sbr.rel target = $region3
  $region8: #{basic_block_forward.3} parent=0 // loop_exit
    _

// kernel: basic_block_forward.4
$region0: #{basic_block_forward.4}
  #allocation0 [shape = 'u32[]', space=smem, size = 0x4, offset = 0x4, fixed_abs, tag = 'smem constant byte address 0x4 - core index']
  #allocation1 [shape = 'u32[144,128]{1,0:T(1,128)}', space=vmem, size = 0x12000, scoped, tag = 'internal scratch']
  %s0 = inlined_call_operand.vmem [shape: f32[2,32,8], index: 0, kind: input, shape index: {}]
  %s1 = inlined_call_operand.vmem [shape: f32[1,8], index: 1, kind: input, shape index: {}]
  %s2 = inlined_call_operand.vmem [shape: f32[1,8], index: 2, kind: input, shape index: {}]
  %s3 = inlined_call_operand.vmem [shape: f32[3,8,8], index: 3, kind: input, shape index: {}]
  %s4 = inlined_call_operand.vmem [shape: f32[1,8], index: 4, kind: input, shape index: {}]
  %s5 = inlined_call_operand.vmem [shape: f32[2,16,8], index: 5, kind: output, shape index: {0}]
  %s6 = inlined_call_operand.vmem [shape: f32[2,2,8], index: 6, kind: output, shape index: {1}]
  %7 = xla_tuple %s5, %s6
  %s8 = sld [smem:[#allocation0]]
  $region61: #{basic_block_forward.4} parent=0
    _
  %s10 = ssub.s32 1, %s8
  %s11 = scalar_select 0, %s10, %s8
  loop: start=0, step=1, limit=4
  $region2: #{basic_block_forward.4} parent=0 // loop_pre_header
    _
  $region3: #{basic_block_forward.4} parent=0 // loop_header
    %s13 = sphi 0, %s17
    %p14 = scmp.ge.s32.totalorder %s13, 4
    %s23 = sphi 0, %s25
    %s26 = sphi 0, %s23
    %s27 = sphi 0, %s26
    %s43 = sphi 0, %s27
    %s47 = sphi 0, %s47
    %s49 = sphi 0, %s47
    %s50 = sphi 0, %s49
    %s64 = sphi 0, %s50
    %s68 = sphi 0, %s68
    %s70 = sphi 0, %s68
    %s71 = sphi 0, %s70
    %s85 = sphi 0, %s71
    %s89 = sphi 0, %s89
    %s91 = sphi 0, %s89
    %s92 = sphi 0, %s91
    %s106 = sphi 0, %s92
    %s110 = sphi 0, %s110
    %s112 = sphi 0, %s110
    %s113 = sphi 0, %s112
    %s127 = sphi 0, %s113
    %s133 = sphi 0, %s135
    %s136 = sphi 0, %s133
    %s137 = sphi 0, %s136
    %s153 = sphi 0, %s137
    %s159 = sphi 0, %s161
    %s162 = sphi 0, %s159
    %s163 = sphi 0, %s162
    %s179 = sphi 0, %s163
  $region4: #{basic_block_forward.4} parent=0 // loop_header_branch
    %16 = sbr.rel (%p14) target = $region8
  $region5: #{basic_block_forward.4} parent=0 // loop_body
    %s18 = ssub.s32 %s13, 1
    %s19 = ssub.s32 %s13, 2
    %s20 = sadd.s32 %s13, 1
    %s21 = ssub.s32 %s13, %s20
    %p22 = scmp.eq.s32.totalorder %s21, 0
    %s24 = sadd.s32 %s23, 1
    %s25 = scalar_select %p22, %s23, %s24
    %p28 = pneg %p22
    %p29 = scmp.eq.s32.totalorder %s13, 1
    %p30 = por %p28, %p29
    %p31 = scmp.ne.s32.totalorder %s23, %s26
    %p32 = scmp.eq.s32.totalorder %s13, 0
    %p33 = por %p31, %p32
    %p34 = scmp.ne.s32.totalorder %s23, %s26
    %p35 = scmp.eq.s32.totalorder %s18, 1
    %p36 = por %p34, %p35
    %p37 = scmp.ne.s32.totalorder %s26, %s27
    %p38 = scmp.eq.s32.totalorder %s18, 0
    %p39 = por %p37, %p38
    %p40 = scmp.ne.s32.totalorder %s26, %s27
    %p41 = scmp.eq.s32.totalorder %s19, 1
    %p42 = por %p40, %p41
    %p44 = scmp.ne.s32.totalorder %s27, %s43
    %p45 = scmp.eq.s32.totalorder %s19, 0
    %p46 = por %p44, %p45
    %s48 = sadd.s32 %s47, 1
    %p51 = scmp.eq.s32.totalorder %s13, 1
    %p52 = scmp.ne.s32.totalorder %s47, %s49
    %p53 = scmp.eq.s32.totalorder %s13, 0
    %p54 = por %p52, %p53
    %p55 = scmp.ne.s32.totalorder %s47, %s49
    %p56 = scmp.eq.s32.totalorder %s18, 1
    %p57 = por %p55, %p56
    %p58 = scmp.ne.s32.totalorder %s49, %s50
    %p59 = scmp.eq.s32.totalorder %s18, 0
    %p60 = por %p58, %p59
    %p61 = scmp.ne.s32.totalorder %s49, %s50
    %p62 = scmp.eq.s32.totalorder %s19, 1
    %p63 = por %p61, %p62
    %p65 = scmp.ne.s32.totalorder %s50, %s64
    %p66 = scmp.eq.s32.totalorder %s19, 0
    %p67 = por %p65, %p66
    %s69 = sadd.s32 %s68, 1
    %p72 = scmp.eq.s32.totalorder %s13, 1
    %p73 = scmp.ne.s32.totalorder %s68, %s70
    %p74 = scmp.eq.s32.totalorder %s13, 0
    %p75 = por %p73, %p74
    %p76 = scmp.ne.s32.totalorder %s68, %s70
    %p77 = scmp.eq.s32.totalorder %s18, 1
    %p78 = por %p76, %p77
    %p79 = scmp.ne.s32.totalorder %s70, %s71
    %p80 = scmp.eq.s32.totalorder %s18, 0
    %p81 = por %p79, %p80
    %p82 = scmp.ne.s32.totalorder %s70, %s71
    %p83 = scmp.eq.s32.totalorder %s19, 1
    %p84 = por %p82, %p83
    %p86 = scmp.ne.s32.totalorder %s71, %s85
    %p87 = scmp.eq.s32.totalorder %s19, 0
    %p88 = por %p86, %p87
    %s90 = sadd.s32 %s89, 1
    %p93 = scmp.eq.s32.totalorder %s13, 1
    %p94 = scmp.ne.s32.totalorder %s89, %s91
    %p95 = scmp.eq.s32.totalorder %s13, 0
    %p96 = por %p94, %p95
    %p97 = scmp.ne.s32.totalorder %s89, %s91
    %p98 = scmp.eq.s32.totalorder %s18, 1
    %p99 = por %p97, %p98
    %p100 = scmp.ne.s32.totalorder %s91, %s92
    %p101 = scmp.eq.s32.totalorder %s18, 0
    %p102 = por %p100, %p101
    %p103 = scmp.ne.s32.totalorder %s91, %s92
    %p104 = scmp.eq.s32.totalorder %s19, 1
    %p105 = por %p103, %p104
    %p107 = scmp.ne.s32.totalorder %s92, %s106
    %p108 = scmp.eq.s32.totalorder %s19, 0
    %p109 = por %p107, %p108
    %s111 = sadd.s32 %s110, 1
    %p114 = scmp.eq.s32.totalorder %s13, 1
    %p115 = scmp.ne.s32.totalorder %s110, %s112
    %p116 = scmp.eq.s32.totalorder %s13, 0
    %p117 = por %p115, %p116
    %p118 = scmp.ne.s32.totalorder %s110, %s112
    %p119 = scmp.eq.s32.totalorder %s18, 1
    %p120 = por %p118, %p119
    %p121 = scmp.ne.s32.totalorder %s112, %s113
    %p122 = scmp.eq.s32.totalorder %s18, 0
    %p123 = por %p121, %p122
    %p124 = scmp.ne.s32.totalorder %s112, %s113
    %p125 = scmp.eq.s32.totalorder %s19, 1
    %p126 = por %p124, %p125
    %p128 = scmp.ne.s32.totalorder %s113, %s127
    %p129 = scmp.eq.s32.totalorder %s19, 0
    %p130 = por %p128, %p129
    %s131 = ssub.s32 %s13, %s20
    %p132 = scmp.eq.s32.totalorder %s131, 0
    %s134 = sadd.s32 %s133, 1
    %s135 = scalar_select %p132, %s133, %s134
    %p138 = pneg %p132
    %p139 = scmp.eq.s32.totalorder %s13, 1
    %p140 = por %p138, %p139
    %p141 = scmp.ne.s32.totalorder %s133, %s136
    %p142 = scmp.eq.s32.totalorder %s13, 0
    %p143 = por %p141, %p142
    %p144 = scmp.ne.s32.totalorder %s133, %s136
    %p145 = scmp.eq.s32.totalorder %s18, 1
    %p146 = por %p144, %p145
    %p147 = scmp.ne.s32.totalorder %s136, %s137
    %p148 = scmp.eq.s32.totalorder %s18, 0
    %p149 = por %p147, %p148
    %p150 = scmp.ne.s32.totalorder %s136, %s137
    %p151 = scmp.eq.s32.totalorder %s19, 1
    %p152 = por %p150, %p151
    %p154 = scmp.ne.s32.totalorder %s137, %s153
    %p155 = scmp.eq.s32.totalorder %s19, 0
    %p156 = por %p154, %p155
    %s157 = ssub.s32 %s13, %s20
    %p158 = scmp.eq.s32.totalorder %s157, 0
    %s160 = sadd.s32 %s159, 1
    %s161 = scalar_select %p158, %s159, %s160
    %p164 = pneg %p158
    %p165 = scmp.eq.s32.totalorder %s13, 1
    %p166 = por %p164, %p165
    %p167 = scmp.ne.s32.totalorder %s159, %s162
    %p168 = scmp.eq.s32.totalorder %s13, 0
    %p169 = por %p167, %p168
    %p170 = scmp.ne.s32.totalorder %s159, %s162
    %p171 = scmp.eq.s32.totalorder %s18, 1
    %p172 = por %p170, %p171
    %p173 = scmp.ne.s32.totalorder %s162, %s163
    %p174 = scmp.eq.s32.totalorder %s18, 0
    %p175 = por %p173, %p174
    %p176 = scmp.ne.s32.totalorder %s162, %s163
    %p177 = scmp.eq.s32.totalorder %s19, 1
    %p178 = por %p176, %p177
    %p180 = scmp.ne.s32.totalorder %s163, %s179
    %p181 = scmp.eq.s32.totalorder %s19, 0
    %p182 = por %p180, %p181
    %p183 = scmp.le.s32.totalorder 1, %s13
    %p184 = scmp.lt.s32.totalorder %s13, 3
    %p185 = pnand %p183, %p184
    %p186 = pneg %p185
    // Predicated region
    $region9: #{basic_block_forward.4} parent=5 // pred_check
      _
    $region10: #{basic_block_forward.4} parent=5 // pred_check_branch
      %188 = sbr.rel (%p185) target = $region12
    $region11: #{basic_block_forward.4} parent=5 // pred_region
      %s189 = ssub.s32 %s13, 1
      // Predicated region
      $region13: #{basic_block_forward.4} parent=11 // pred_check
        %p190 = pneg %p60
      $region14: #{basic_block_forward.4} parent=11 // pred_check_branch
        %192 = sbr.rel (%p190) target = $region16
      $region15: #{basic_block_forward.4} parent=11 // pred_region
        _
      $region16: #{basic_block_forward.4} parent=11 // pred_fallthru
        _
      // Predicated region
      $region17: #{basic_block_forward.4} parent=11 // pred_check
        %p193 = pneg %p81
      $region18: #{basic_block_forward.4} parent=11 // pred_check_branch
        %195 = sbr.rel (%p193) target = $region20
      $region19: #{basic_block_forward.4} parent=11 // pred_region
        _
      $region20: #{basic_block_forward.4} parent=11 // pred_fallthru
        _
      // Predicated region
      $region21: #{basic_block_forward.4} parent=11 // pred_check
        %p196 = pneg %p102
      $region22: #{basic_block_forward.4} parent=11 // pred_check_branch
        %198 = sbr.rel (%p196) target = $region24
      $region23: #{basic_block_forward.4} parent=11 // pred_region
        _
      $region24: #{basic_block_forward.4} parent=11 // pred_fallthru
        _
      // Predicated region
      $region25: #{basic_block_forward.4} parent=11 // pred_check
        %p199 = pneg %p123
      $region26: #{basic_block_forward.4} parent=11 // pred_check_branch
        %201 = sbr.rel (%p199) target = $region28
      $region27: #{basic_block_forward.4} parent=11 // pred_region
        _
      $region28: #{basic_block_forward.4} parent=11 // pred_fallthru
        _
    $region12: #{basic_block_forward.4} parent=5 // pred_fallthru
      _
    %p202 = scmp.lt.s32.totalorder %s13, 2
    // Predicated region
    $region29: #{basic_block_forward.4} parent=5 // pred_check
      %p203 = pneg %p202
    $region30: #{basic_block_forward.4} parent=5 // pred_check_branch
      %205 = sbr.rel (%p203) target = $region32
    $region31: #{basic_block_forward.4} parent=5 // pred_region
      // Predicated region
      $region33: #{basic_block_forward.4} parent=31 // pred_check
        %p206 = pneg %p33
      $region34: #{basic_block_forward.4} parent=31 // pred_check_branch
        %208 = sbr.rel (%p206) target = $region36
      $region35: #{basic_block_forward.4} parent=31 // pred_region
        %p209 = scmp.lt.s32.totalorder %s13, 1
        %s210 = scalar_select %p209, %s13, 1
        %s211 = smul.addr %s210, 4
        %s212 = smul.addr %s211, 8
        %s213 = scalar_lea.vmem %s0, %s212
      $region36: #{basic_block_forward.4} parent=31 // pred_fallthru
        _
    $region32: #{basic_block_forward.4} parent=5 // pred_fallthru
      _
    %p214 = scmp.le.s32.totalorder 1, %s13
    %p215 = scmp.lt.s32.totalorder %s13, 3
    %p216 = pnand %p214, %p215
    %p217 = pneg %p216
    // Predicated region
    $region37: #{basic_block_forward.4} parent=5 // pred_check
      _
    $region38: #{basic_block_forward.4} parent=5 // pred_check_branch
      %219 = sbr.rel (%p216) target = $region40
    $region39: #{basic_block_forward.4} parent=5 // pred_region
      %s220 = ssub.s32 %s13, 1
      %p221 = scmp.lt.s32.totalorder %s18, 1
      %s222 = scalar_select %p221, %s18, 1
      %s223 = smul.addr %s222, 4
      %s224 = smul.addr %s223, 8
      %s225 = scalar_lea.vmem %s0, %s224
      %p226 = pneg %p39
      %p227 = pneg %p36
      %p228 = pneg %p60
      %p229 = pneg %p57
      %p230 = pneg %p81
      %p231 = pneg %p78
      %p232 = pneg %p102
      %p233 = pneg %p99
      %p234 = pneg %p123
      %p235 = pneg %p120
      %p236 = pneg %p149
      %p237 = pneg %p146
      %p238 = scmp.lt.s32.totalorder %s18, 1
      %s239 = scalar_select %p238, %s18, 1
      %s240 = smul.addr %s239, 2
      %s241 = smul.addr %s240, 8
      %s242 = scalar_lea.vmem %s5, %s241
      %p243 = pneg %p175
      %p244 = pneg %p172
      %p245 = scmp.lt.s32.totalorder %s18, 1
      %s246 = scalar_select %p245, %s18, 1
      %s247 = smul.addr %s246, 2
      %s248 = scalar_lea.vmem %s6, %s247
      %p249 = scmp.lt.s32.totalorder %s18, 1
      %s250 = scalar_select %p249, %s18, 1
      %s251 = smul.addr %s250, 4
      %s252 = smul.addr %s251, 8
      %s253 = scalar_lea.vmem %s0, %s252
      %p254 = scmp.lt.s32.totalorder %s18, 1
      %s255 = scalar_select %p254, %s18, 1
      %s256 = smul.addr %s255, 2
      %s257 = smul.addr %s256, 8
      %s258 = scalar_lea.vmem %s5, %s257
      %p259 = scmp.lt.s32.totalorder %s18, 1
      %s260 = scalar_select %p259, %s18, 1
      %s261 = smul.addr %s260, 2
      %s262 = scalar_lea.vmem %s6, %s261
      %v263 = vld [vmem:[%s253] sm:$0xff]
      %v264 = vld [vmem:[%s253 + $0x8] sm:$0xff]
      %v265 = vld [vmem:[%s253 + $0x10] sm:$0xff]
      %v266 = vld [vmem:[%s253 + $0x18] sm:$0xff]
      %v267 = vld [vmem:[%s1] sm:$0x1]
      %v269 = vlaneseq
      %v270 = vshrl.u32 %v269, 7
      %v271 = vsub.s32 0, %v270
      %v272 = vrot.slane %v267, %v271
      %v274 = vmul.f32 %v263, %v272
      %v275 = vmul.f32 %v264, %v272
      %v276 = vmul.f32 %v265, %v272
      %v277 = vmul.f32 %v266, %v272
      %v278 = vld [vmem:[%s2] sm:$0x1]
      %v280 = vlaneseq
      %v281 = vshrl.u32 %v280, 7
      %v282 = vsub.s32 0, %v281
      %v283 = vrot.slane %v278, %v282
      %v285 = vadd.f32 %v274, %v283
      %v286 = vadd.f32 %v275, %v283
      %v287 = vadd.f32 %v276, %v283
      %v288 = vadd.f32 %v277, %v283
      %vm289 = vcmp.ge.f32.partialorder %v285, 0.0
      %vm290 = vcmp.ge.f32.partialorder %v286, 0.0
      %vm291 = vcmp.ge.f32.partialorder %v287, 0.0
      %vm292 = vcmp.ge.f32.partialorder %v288, 0.0
      %v293 = vmul.f32 %v285, 0.01
      %v294 = vmul.f32 %v286, 0.01
      %v295 = vmul.f32 %v287, 0.01
      %v296 = vmul.f32 %v288, 0.01
      %v297 = vsel %vm289, %v285, %v293
      %v298 = vsel %vm290, %v286, %v294
      %v299 = vsel %vm291, %v287, %v295
      %v300 = vsel %vm292, %v288, %v296
      %v301 = vlaneseq
      %v302 = vshrl.u32 %v301, 7
      %v303 = vadd.s32 %v302, 8
      %v304 = vadd.s32 %v302, 16
      %v305 = vadd.s32 %v302, 24
      %vm306 = vcmp.ge.s32.totalorder %v302, 8
      %vm307 = vcmp.ge.s32.totalorder %v303, 8
      %vm308 = vcmp.ge.s32.totalorder %v304, 8
      %vm309 = vcmp.ge.s32.totalorder %v305, 8
      %vm310 = vcmp.lt.s32.totalorder %v302, 24
      %vm311 = vcmp.lt.s32.totalorder %v303, 24
      %vm312 = vcmp.lt.s32.totalorder %v304, 24
      %vm313 = vcmp.lt.s32.totalorder %v305, 24
      %vm314 = vmand %vm306, %vm310
      %vm315 = vmand %vm307, %vm311
      %vm316 = vmand %vm308, %vm312
      %vm317 = vmand %vm309, %vm313
      %v318 = vsel %vm314, %v297, 0.0
      %v319 = vsel %vm315, %v298, 0.0
      %v320 = vsel %vm316, %v299, 0.0
      %v321 = vsel %vm317, %v300, 0.0
      %v322 = vld [vmem:[%s4] sm:$0x1]
      %v323 = vld [vmem:[%s3] sm:$0xff]
      %s324 = scalar_lea.vmem %s3, 8
      %v325 = vld [vmem:[%s324] sm:$0xff]
      %vm326 = vcmask 64512
      %v328 = vsel %vm326, %v319, 0
      %v331 = vsel %vm326, %v320, 0
      %333 = vmatprep.subr.mxu0 0.0
      %334 = vmatpush1.msra.mxu0 %v325
      %335 = vmatprep.subr.mxu0 0.0
      %336 = vmatpush1.msra.mxu0 0.0
      %337 = vmatprep.subr.mxu0 0.0
      %338 = vmatpush1.msra.mxu0 0.0
      %339 = vmatprep.subr.mxu0 0.0
      %340 = vmatpush1.msra.mxu0 0.0
      %341 = vmatprep.subr.mxu0 0.0
      %342 = vmatpush1.msra.mxu0 0.0
      %343 = vmatprep.subr.mxu0 0.0
      %344 = vmatpush1.msra.mxu0 0.0
      %345 = vmatprep.subr.mxu0 0.0
      %346 = vmatpush1.msra.mxu0 0.0
      %347 = vmatprep.subr.mxu0 0.0
      %348 = vmatpush1.msra.mxu0 0.0
      %349 = vmatprep.subr.mxu0 0.0
      %350 = vmatpush1.msra.mxu0 0.0
      %351 = vmatprep.subr.mxu0 0.0
      %352 = vmatpush1.msra.mxu0 0.0
      %353 = vmatprep.subr.mxu0 0.0
      %354 = vmatpush1.msra.mxu0 0.0
      %355 = vmatprep.subr.mxu0 0.0
      %356 = vmatpush1.msra.mxu0 0.0
      %357 = vmatprep.subr.mxu0 0.0
      %358 = vmatpush1.msra.mxu0 0.0
      %359 = vmatprep.subr.mxu0 0.0
      %360 = vmatpush1.msra.mxu0 0.0
      %361 = vmatprep.subr.mxu0 0.0
      %362 = vmatpush1.msra.mxu0 0.0
      %363 = vmatprep.subr.mxu0 0.0
      %364 = vmatpush1.msra.mxu0 0.0
      %365 = vmatprep.subr.mxu0 0.0
      %366 = vmatpush1.msra.mxu0 0.0
      %367 = vmatprep.subr.mxu0 0.0
      %368 = vmatpush1.msra.mxu0 0.0
      %369 = vmatprep.subr.mxu0 0.0
      %370 = vmatpush1.msra.mxu0 0.0
      %371 = vmatprep.subr.mxu0 0.0
      %372 = vmatpush1.msra.mxu0 0.0
      %373 = vmatprep.subr.mxu0 0.0
      %374 = vmatpush1.msra.mxu0 0.0
      %375 = vmatprep.subr.mxu0 0.0
      %376 = vmatpush1.msra.mxu0 0.0
      %377 = vmatprep.subr.mxu0 0.0
      %378 = vmatpush1.msra.mxu0 0.0
      %379 = vmatprep.subr.mxu0 0.0
      %380 = vmatpush1.msra.mxu0 0.0
      %381 = vmatprep.subr.mxu0 0.0
      %382 = vmatpush1.msra.mxu0 0.0
      %383 = vmatprep.subr.mxu0 0.0
      %384 = vmatpush1.msra.mxu0 0.0
      %385 = vmatprep.subr.mxu0 0.0
      %386 = vmatpush1.msra.mxu0 0.0
      %387 = vmatprep.subr.mxu0 0.0
      %388 = vmatpush1.msra.mxu0 0.0
      %389 = vmatprep.subr.mxu0 0.0
      %390 = vmatpush1.msra.mxu0 0.0
      %391 = vmatprep.subr.mxu0 0.0
      %392 = vmatpush1.msra.mxu0 0.0
      %393 = vmatprep.subr.mxu0 0.0
      %394 = vmatpush1.msra.mxu0 0.0
      %395 = vmatprep.subr.mxu0 0.0
      %396 = vmatpush1.msra.mxu0 0.0
      %397 = vmatprep.mubr.f32.mxu0 0.0
      %398 = vmatmul.mubr.f32.gmra.mrb[0].mxu0 %v328
      %v399 = vpop.f32.mrb[0].mxu0
      %v400 = vadd.f32 0.0, %v399
      %v401 = vpop.f32.mrb[0].mxu0
      %402 = vmatprep.mubr.f32.mxu0 0.0
      %403 = vmatmul.mubr.f32.gmra.mrb[0].mxu0 %v331
      %v404 = vpop.f32.mrb[0].mxu0
      %v405 = vadd.f32 0.0, %v404
      %v406 = vpop.f32.mrb[0].mxu0
      %407 = vdwg.mxu0
      %vm409 = vcmask 1040384
      %v410 = vrot.slane %v318, 7
      %v411 = vrot.slane %v319, 7
      %v412 = vsel %vm409, %v410, %v411
      %v413 = vrot.slane %v320, 7
      %v414 = vsel %vm409, %v411, %v413
      %v415 = vsel %vm326, %v412, 0
      %v417 = vsel %vm326, %v414, 0
      %419 = vmatprep.subr.mxu0 0.0
      %420 = vmatpush1.msra.mxu0 %v323
      %421 = vmatprep.subr.mxu0 0.0
      %422 = vmatpush1.msra.mxu0 0.0
      %423 = vmatprep.subr.mxu0 0.0
      %424 = vmatpush1.msra.mxu0 0.0
      %425 = vmatprep.subr.mxu0 0.0
      %426 = vmatpush1.msra.mxu0 0.0
      %427 = vmatprep.subr.mxu0 0.0
      %428 = vmatpush1.msra.mxu0 0.0
      %429 = vmatprep.subr.mxu0 0.0
      %430 = vmatpush1.msra.mxu0 0.0
      %431 = vmatprep.subr.mxu0 0.0
      %432 = vmatpush1.msra.mxu0 0.0
      %433 = vmatprep.subr.mxu0 0.0
      %434 = vmatpush1.msra.mxu0 0.0
      %435 = vmatprep.subr.mxu0 0.0
      %436 = vmatpush1.msra.mxu0 0.0
      %437 = vmatprep.subr.mxu0 0.0
      %438 = vmatpush1.msra.mxu0 0.0
      %439 = vmatprep.subr.mxu0 0.0
      %440 = vmatpush1.msra.mxu0 0.0
      %441 = vmatprep.subr.mxu0 0.0
      %442 = vmatpush1.msra.mxu0 0.0
      %443 = vmatprep.subr.mxu0 0.0
      %444 = vmatpush1.msra.mxu0 0.0
      %445 = vmatprep.subr.mxu0 0.0
      %446 = vmatpush1.msra.mxu0 0.0
      %447 = vmatprep.subr.mxu0 0.0
      %448 = vmatpush1.msra.mxu0 0.0
      %449 = vmatprep.subr.mxu0 0.0
      %450 = vmatpush1.msra.mxu0 0.0
      %451 = vmatprep.subr.mxu0 0.0
      %452 = vmatpush1.msra.mxu0 0.0
      %453 = vmatprep.subr.mxu0 0.0
      %454 = vmatpush1.msra.mxu0 0.0
      %455 = vmatprep.subr.mxu0 0.0
      %456 = vmatpush1.msra.mxu0 0.0
      %457 = vmatprep.subr.mxu0 0.0
      %458 = vmatpush1.msra.mxu0 0.0
      %459 = vmatprep.subr.mxu0 0.0
      %460 = vmatpush1.msra.mxu0 0.0
      %461 = vmatprep.subr.mxu0 0.0
      %462 = vmatpush1.msra.mxu0 0.0
      %463 = vmatprep.subr.mxu0 0.0
      %464 = vmatpush1.msra.mxu0 0.0
      %465 = vmatprep.subr.mxu0 0.0
      %466 = vmatpush1.msra.mxu0 0.0
      %467 = vmatprep.subr.mxu0 0.0
      %468 = vmatpush1.msra.mxu0 0.0
      %469 = vmatprep.subr.mxu0 0.0
      %470 = vmatpush1.msra.mxu0 0.0
      %471 = vmatprep.subr.mxu0 0.0
      %472 = vmatpush1.msra.mxu0 0.0
      %473 = vmatprep.subr.mxu0 0.0
      %474 = vmatpush1.msra.mxu0 0.0
      %475 = vmatprep.subr.mxu0 0.0
      %476 = vmatpush1.msra.mxu0 0.0
      %477 = vmatprep.subr.mxu0 0.0
      %478 = vmatpush1.msra.mxu0 0.0
      %479 = vmatprep.subr.mxu0 0.0
      %480 = vmatpush1.msra.mxu0 0.0
      %481 = vmatprep.subr.mxu0 0.0
      %482 = vmatpush1.msra.mxu0 0.0
      %483 = vmatprep.mubr.f32.mxu0 0.0
      %484 = vmatmul.mubr.f32.gmra.mrb[0].mxu0 %v415
      %v485 = vpop.f32.mrb[0].mxu0
      %v486 = vadd.f32 %v400, %v485
      %v487 = vpop.f32.mrb[0].mxu0
      %488 = vmatprep.mubr.f32.mxu0 0.0
      %489 = vmatmul.mubr.f32.gmra.mrb[0].mxu0 %v417
      %v490 = vpop.f32.mrb[0].mxu0
      %v491 = vadd.f32 %v405, %v490
      %v492 = vpop.f32.mrb[0].mxu0
      %493 = vdwg.mxu0
      %s494 = scalar_lea.vmem %s3, 16
      %v495 = vld [vmem:[%s494] sm:$0xff]
      %vm497 = vcmask 1046528
      %v498 = vrot.slane %v319, 1
      %v499 = vrot.slane %v320, 1
      %v500 = vsel %vm497, %v498, %v499
      %v501 = vrot.slane %v321, 1
      %v502 = vsel %vm497, %v499, %v501
      %v503 = vsel %vm326, %v500, 0
      %v505 = vsel %vm326, %v502, 0
      %507 = vmatprep.subr.mxu0 0.0
      %508 = vmatpush1.msra.mxu0 %v495
      %509 = vmatprep.subr.mxu0 0.0
      %510 = vmatpush1.msra.mxu0 0.0
      %511 = vmatprep.subr.mxu0 0.0
      %512 = vmatpush1.msra.mxu0 0.0
      %513 = vmatprep.subr.mxu0 0.0
      %514 = vmatpush1.msra.mxu0 0.0
      %515 = vmatprep.subr.mxu0 0.0
      %516 = vmatpush1.msra.mxu0 0.0
      %517 = vmatprep.subr.mxu0 0.0
      %518 = vmatpush1.msra.mxu0 0.0
      %519 = vmatprep.subr.mxu0 0.0
      %520 = vmatpush1.msra.mxu0 0.0
      %521 = vmatprep.subr.mxu0 0.0
      %522 = vmatpush1.msra.mxu0 0.0
      %523 = vmatprep.subr.mxu0 0.0
      %524 = vmatpush1.msra.mxu0 0.0
      %525 = vmatprep.subr.mxu0 0.0
      %526 = vmatpush1.msra.mxu0 0.0
      %527 = vmatprep.subr.mxu0 0.0
      %528 = vmatpush1.msra.mxu0 0.0
      %529 = vmatprep.subr.mxu0 0.0
      %530 = vmatpush1.msra.mxu0 0.0
      %531 = vmatprep.subr.mxu0 0.0
      %532 = vmatpush1.msra.mxu0 0.0
      %533 = vmatprep.subr.mxu0 0.0
      %534 = vmatpush1.msra.mxu0 0.0
      %535 = vmatprep.subr.mxu0 0.0
      %536 = vmatpush1.msra.mxu0 0.0
      %537 = vmatprep.subr.mxu0 0.0
      %538 = vmatpush1.msra.mxu0 0.0
      %539 = vmatprep.subr.mxu0 0.0
      %540 = vmatpush1.msra.mxu0 0.0
      %541 = vmatprep.subr.mxu0 0.0
      %542 = vmatpush1.msra.mxu0 0.0
      %543 = vmatprep.subr.mxu0 0.0
      %544 = vmatpush1.msra.mxu0 0.0
      %545 = vmatprep.subr.mxu0 0.0
      %546 = vmatpush1.msra.mxu0 0.0
      %547 = vmatprep.subr.mxu0 0.0
      %548 = vmatpush1.msra.mxu0 0.0
      %549 = vmatprep.subr.mxu0 0.0
      %550 = vmatpush1.msra.mxu0 0.0
      %551 = vmatprep.subr.mxu0 0.0
      %552 = vmatpush1.msra.mxu0 0.0
      %553 = vmatprep.subr.mxu0 0.0
      %554 = vmatpush1.msra.mxu0 0.0
      %555 = vmatprep.subr.mxu0 0.0
      %556 = vmatpush1.msra.mxu0 0.0
      %557 = vmatprep.subr.mxu0 0.0
      %558 = vmatpush1.msra.mxu0 0.0
      %559 = vmatprep.subr.mxu0 0.0
      %560 = vmatpush1.msra.mxu0 0.0
      %561 = vmatprep.subr.mxu0 0.0
      %562 = vmatpush1.msra.mxu0 0.0
      %563 = vmatprep.subr.mxu0 0.0
      %564 = vmatpush1.msra.mxu0 0.0
      %565 = vmatprep.subr.mxu0 0.0
      %566 = vmatpush1.msra.mxu0 0.0
      %567 = vmatprep.subr.mxu0 0.0
      %568 = vmatpush1.msra.mxu0 0.0
      %569 = vmatprep.subr.mxu0 0.0
      %570 = vmatpush1.msra.mxu0 0.0
      %571 = vmatprep.mubr.f32.mxu0 0.0
      %572 = vmatmul.mubr.f32.gmra.mrb[0].mxu0 %v503
      %v573 = vpop.f32.mrb[0].mxu0
      %v574 = vadd.f32 0.0, %v573
      %v575 = vpop.f32.mrb[0].mxu0
      %576 = vmatprep.mubr.f32.mxu0 0.0
      %577 = vmatmul.mubr.f32.gmra.mrb[0].mxu0 %v505
      %v578 = vpop.f32.mrb[0].mxu0
      %v579 = vadd.f32 0.0, %v578
      %v580 = vpop.f32.mrb[0].mxu0
      %581 = vdwg.mxu0
      %v582 = vadd.f32 %v486, %v574
      %v583 = vadd.f32 %v491, %v579
      %v585 = vlaneseq
      %v586 = vshrl.u32 %v585, 7
      %v587 = vsub.s32 0, %v586
      %v588 = vrot.slane %v322, %v587
      %v590 = vadd.f32 %v582, %v588
      %v591 = vadd.f32 %v583, %v588
      %v592 = vsel %vm326, %v590, 0.0
      %v593 = vsel %vm326, %v591, 0.0
      %v594 = vadd.f32 %v592, %v593
      %v595 = vrot.slane %v594, 4
      %v596 = vadd.f32 %v594, %v595
      %v597 = vrot.slane %v596, 2
      %v598 = vadd.f32 %v596, %v597
      %v599 = vrot.slane %v598, 1
      %v600 = vadd.f32 %v598, %v599
      %v601 = vrcp.pop 16.0
      %v602 = vmul.f32 %v600, %v601
      %v603 = vsub.f32 %v590, %v602
      %v604 = vsub.f32 %v591, %v602
      %v605 = vmul.f32 %v603, %v603
      %v606 = vmul.f32 %v604, %v604
      %v607 = vsel %vm326, %v605, 0.0
      %v608 = vsel %vm326, %v606, 0.0
      %v609 = vadd.f32 %v607, %v608
      %v610 = vrot.slane %v609, 4
      %v611 = vadd.f32 %v609, %v610
      %v612 = vrot.slane %v611, 2
      %v613 = vadd.f32 %v611, %v612
      %v614 = vrot.slane %v613, 1
      %v615 = vadd.f32 %v613, %v614
      %vm616 = vcmask 57344
      %617 = vst.msk [vmem:[%s262] sm:$0x1] %vm616, %v602
      %618 = vst.msk [vmem:[%s262 + $0x1] sm:$0x1] %vm616, %v615
      %619 = vst.msk [vmem:[%s258] sm:$0xff] %vm326, %v590
      %620 = vst.msk [vmem:[%s258 + $0x8] sm:$0xff] %vm326, %v591
      %p621 = scmp.lt.s32.totalorder %s18, 1
      %s622 = scalar_select %p621, %s18, 1
      %s623 = smul.addr %s622, 2
      %s624 = smul.addr %s623, 8
      %s625 = scalar_lea.vmem %s5, %s624
      %p626 = scmp.lt.s32.totalorder %s18, 1
      %s627 = scalar_select %p626, %s18, 1
      %s628 = smul.addr %s627, 2
      %s629 = scalar_lea.vmem %s6, %s628
      // Predicated region
      $region41: #{basic_block_forward.4} parent=39 // pred_check
        %p630 = pneg %p146
      $region42: #{basic_block_forward.4} parent=39 // pred_check_branch
        %632 = sbr.rel (%p630) target = $region44
      $region43: #{basic_block_forward.4} parent=39 // pred_region
        _
      $region44: #{basic_block_forward.4} parent=39 // pred_fallthru
        _
      // Predicated region
      $region45: #{basic_block_forward.4} parent=39 // pred_check
        %p633 = pneg %p172
      $region46: #{basic_block_forward.4} parent=39 // pred_check_branch
        %635 = sbr.rel (%p633) target = $region48
      $region47: #{basic_block_forward.4} parent=39 // pred_region
        _
      $region48: #{basic_block_forward.4} parent=39 // pred_fallthru
        _
    $region40: #{basic_block_forward.4} parent=5 // pred_fallthru
      _
    %p636 = scmp.le.s32.totalorder 2, %s13
    // Predicated region
    $region49: #{basic_block_forward.4} parent=5 // pred_check
      %p637 = pneg %p636
    $region50: #{basic_block_forward.4} parent=5 // pred_check_branch
      %639 = sbr.rel (%p637) target = $region52
    $region51: #{basic_block_forward.4} parent=5 // pred_region
      %s640 = ssub.s32 %s13, 2
      // Predicated region
      $region53: #{basic_block_forward.4} parent=51 // pred_check
        %p641 = pneg %p152
      $region54: #{basic_block_forward.4} parent=51 // pred_check_branch
        %643 = sbr.rel (%p641) target = $region56
      $region55: #{basic_block_forward.4} parent=51 // pred_region
        %p644 = scmp.lt.s32.totalorder %s19, 1
        %s645 = scalar_select %p644, %s19, 1
        %s646 = smul.addr %s645, 2
        %s647 = smul.addr %s646, 8
        %s648 = scalar_lea.vmem %s5, %s647
      $region56: #{basic_block_forward.4} parent=51 // pred_fallthru
        _
      // Predicated region
      $region57: #{basic_block_forward.4} parent=51 // pred_check
        %p649 = pneg %p178
      $region58: #{basic_block_forward.4} parent=51 // pred_check_branch
        %651 = sbr.rel (%p649) target = $region60
      $region59: #{basic_block_forward.4} parent=51 // pred_region
        %p652 = scmp.lt.s32.totalorder %s19, 1
        %s653 = scalar_select %p652, %s19, 1
        %s654 = smul.addr %s653, 2
        %s655 = scalar_lea.vmem %s6, %s654
      $region60: #{basic_block_forward.4} parent=51 // pred_fallthru
        _
    $region52: #{basic_block_forward.4} parent=5 // pred_fallthru
      _
  $region6: #{basic_block_forward.4} parent=0 // loop_footer
    %s17 = sadd.s32 1, %s13
  $region7: #{basic_block_forward.4} parent=0 // loop_footer_branch
    %12 = sbr.rel target = $region3
  $region8: #{basic_block_forward.4} parent=0 // loop_exit
    _

</llo_original>
